<compile_context>
chip_gen: v6e
topology: v6e:2x2x1
jax: 0.10.0
libtpu: 0.0.40
codegen_flags: <defaults>
</compile_context>

<pallas_src>
import jax
import jax.numpy as jnp
from jax import lax
from jax.experimental import pallas as pl
from jax.experimental.pallas import tpu as pltpu

EPS = 1e-4
NEG_SLOPE = 0.01                        # F.leaky_relu default
LANE = 128
MAX_TILE = 4096                         # K / N tile for the large-x_dim split path
FUSED_VMEM_BUDGET = 20 * 1024 * 1024    # conservative fully-resident budget (all gens)
VMEM_LIMIT = 32 * 1024 * 1024           # explicit scoped-VMEM limit (safe on v5e/v6e/v7x)


def _round_up(n, m):
    return (n + m - 1) // m * m


def _bf16(a):
    return a.astype(jnp.bfloat16)


def _bn_lrelu(z):
    """BatchNorm1d (train mode, affine=False, eps=1e-4) -> leaky_relu(0.01), one-pass stats."""
    inv_b = 1.0 / z.shape[0]
    mean = jnp.sum(z, axis=0, keepdims=True) * inv_b
    msq = jnp.sum(z * z, axis=0, keepdims=True) * inv_b
    var = jnp.maximum(msq - mean * mean, 0.0)   # biased variance, clamped before rsqrt
    zn = (z - mean) * lax.rsqrt(var + EPS)
    return jnp.where(zn >= 0, zn, NEG_SLOPE * zn)


# ---------------------------------------------------------------------------
# Fused kernel (small / medium x_dim): everything resident in VMEM, one launch.
# ---------------------------------------------------------------------------
def _fused_kernel(x_ref, w1_ref, w2_ref, wcd_ref, wd2_ref, wr_ref, out_ref):
    # x is DMA'd as f32 and cast to bf16 on the VPU (avoids an HBM bf16 copy per forward).
    h1 = _bn_lrelu(jnp.dot(_bf16(x_ref[...]), w1_ref[...],
                           preferred_element_type=jnp.float32))
    h2 = _bn_lrelu(jnp.dot(_bf16(h1), w2_ref[...], preferred_element_type=jnp.float32))
    # code layer folded into decoder layer 1: wcd = wc @ wd1 (no nonlinearity between them)
    h4 = _bn_lrelu(jnp.dot(_bf16(h2), wcd_ref[...], preferred_element_type=jnp.float32))
    h5 = _bn_lrelu(jnp.dot(_bf16(h4), wd2_ref[...], preferred_element_type=jnp.float32))
    rec = jnp.dot(_bf16(h5), wr_ref[...], preferred_element_type=jnp.float32)
    out_ref[...] = jax.nn.sigmoid(rec).astype(out_ref.dtype)


# ---------------------------------------------------------------------------
# Split path, kernel 1 (large x_dim): K-tiled first Linear, small layers fused at last step.
# Produces h5 (output of the decoder's second hidden layer), shape (B, 128), bf16.
# ---------------------------------------------------------------------------
def _hidden_kernel(x_ref, w1_ref, w2_ref, wcd_ref, wd2_ref, h5_ref, acc_ref):
    k = pl.program_id(0)

    @pl.when(k == 0)
    def _():
        acc_ref[...] = jnp.zeros_like(acc_ref)

    acc_ref[...] += jnp.dot(_bf16(x_ref[...]), w1_ref[...],
                            preferred_element_type=jnp.float32)

    @pl.when(k == pl.num_programs(0) - 1)
    def _():
        h1 = _bn_lrelu(acc_ref[...])
        h2 = _bn_lrelu(jnp.dot(_bf16(h1), w2_ref[...], preferred_element_type=jnp.float32))
        h4 = _bn_lrelu(jnp.dot(_bf16(h2), wcd_ref[...], preferred_element_type=jnp.float32))
        h5 = _bn_lrelu(jnp.dot(_bf16(h4), wd2_ref[...], preferred_element_type=jnp.float32))
        h5_ref[...] = h5.astype(h5_ref.dtype)


# ---------------------------------------------------------------------------
# Split path, kernel 2: N-tiled reconstruction Linear + sigmoid.
# ---------------------------------------------------------------------------
def _reconstruct_kernel(h5_ref, wr_ref, out_ref):
    rec = jnp.dot(h5_ref[...], wr_ref[...], preferred_element_type=jnp.float32)
    out_ref[...] = jax.nn.sigmoid(rec).astype(out_ref.dtype)


# ---------------------------------------------------------------------------
# Wrappers
# ---------------------------------------------------------------------------
def prepare_params(params):
    """One-time (outside the jitted forward) weight prep: bf16 cast + code-layer folding."""
    w1, w2, wc, wd1, wd2, wr = params
    wcd = jnp.dot(wc.astype(jnp.float32), wd1.astype(jnp.float32))   # (h2, h2)
    return (_bf16(w1), _bf16(w2), _bf16(wcd), _bf16(wd2), _bf16(wr))


def _forward_fused(x2d, w1b, w2b, wcdb, wd2b, wrb):
    b, x_dim = x2d.shape
    h1_dim, h2_dim = w1b.shape[1], w2b.shape[1]
    cost = pl.CostEstimate(
        flops=2 * b * (x_dim * h1_dim + h1_dim * h2_dim + h2_dim * h2_dim
                       + h2_dim * h1_dim + h1_dim * x_dim),
        transcendentals=b * x_dim + 2 * (h1_dim + h2_dim),
        bytes_accessed=4 * b * x_dim                      # x (f32 in)
        + 2 * (x_dim * h1_dim + h1_dim * x_dim            # w1, wr (bf16)
               + h1_dim * h2_dim + h2_dim * h2_dim + h2_dim * h1_dim)
        + 4 * b * x_dim,                                  # output (f32)
    )
    vmem = pl.BlockSpec(memory_space=pltpu.MemorySpace.VMEM)
    return pl.pallas_call(
        _fused_kernel,
        out_shape=jax.ShapeDtypeStruct((b, x_dim), jnp.float32),
        in_specs=[vmem] * 6,
        out_specs=vmem,
        compiler_params=pltpu.CompilerParams(vmem_limit_bytes=VMEM_LIMIT),
        cost_estimate=cost,
    )(x2d, w1b, w2b, wcdb, wd2b, wrb)


def _forward_split(x2d, w1b, w2b, wcdb, wd2b, wrb):
    b, x_dim = x2d.shape
    h1_dim, h2_dim = w1b.shape[1], w2b.shape[1]

    kp = _round_up(x_dim, LANE)
    n_steps = max(1, -(-kp // MAX_TILE))
    tile = _round_up(-(-kp // n_steps), LANE)   # even lane-aligned split of the big dim
    kp = tile * n_steps
    pad = kp - x_dim
    if pad:
        # TODO(synk): for production large-x_dim use, pre-pad x/w1/wr outside the jit too.
        x2d = jnp.pad(x2d, ((0, 0), (0, pad)))
        w1b = jnp.pad(w1b, ((0, pad), (0, 0)))
        wrb = jnp.pad(wrb, ((0, 0), (0, pad)))

    # ---- call 1: encoder + decoder hidden stack -> h5 (b, h1_dim) bf16 ----
    cost1 = pl.CostEstimate(
        flops=2 * b * (kp * h1_dim + h1_dim * h2_dim + h2_dim * h2_dim + h2_dim * h1_dim),
        transcendentals=2 * (h1_dim + h2_dim),
        bytes_accessed=4 * b * kp + 2 * (kp * h1_dim + h1_dim * h2_dim
                                         + h2_dim * h2_dim + h2_dim * h1_dim + b * h1_dim),
    )
    h5 = pl.pallas_call(
        _hidden_kernel,
        out_shape=jax.ShapeDtypeStruct((b, h1_dim), jnp.bfloat16),
        grid_spec=pltpu.PrefetchScalarGridSpec(
            num_scalar_prefetch=0,
            grid=(n_steps,),
            in_specs=[
                pl.BlockSpec((b, tile), lambda k: (0, k)),        # x column tile (f32)
                pl.BlockSpec((tile, h1_dim), lambda k: (k, 0)),   # w1 row tile
                pl.BlockSpec((h1_dim, h2_dim), lambda k: (0, 0)),
                pl.BlockSpec((h2_dim, h2_dim), lambda k: (0, 0)),
                pl.BlockSpec((h2_dim, h1_dim), lambda k: (0, 0)),
            ],
            out_specs=pl.BlockSpec((b, h1_dim), lambda k: (0, 0)),
            scratch_shapes=[pltpu.VMEM((b, h1_dim), jnp.float32)],
        ),
        compiler_params=pltpu.CompilerParams(
            dimension_semantics=("arbitrary",), vmem_limit_bytes=VMEM_LIMIT),
        cost_estimate=cost1,
    )(x2d, w1b, w2b, wcdb, wd2b)

    # ---- call 2: reconstruction + sigmoid, tiled over output columns ----
    cost2 = pl.CostEstimate(
        flops=2 * b * h1_dim * kp,
        transcendentals=b * kp,
        bytes_accessed=2 * (b * h1_dim + h1_dim * kp) + 4 * b * kp,
    )
    out_p = pl.pallas_call(
        _reconstruct_kernel,
        out_shape=jax.ShapeDtypeStruct((b, kp), jnp.float32),
        grid_spec=pltpu.PrefetchScalarGridSpec(
            num_scalar_prefetch=0,
            grid=(n_steps,),
            in_specs=[
                pl.BlockSpec((b, h1_dim), lambda j: (0, 0)),      # h5 (small, resident)
                pl.BlockSpec((h1_dim, tile), lambda j: (0, j)),   # wr column tile
            ],
            out_specs=pl.BlockSpec((b, tile), lambda j: (0, j)),
        ),
        # "parallel" engages v7x's 2nd TensorCore when n_steps >= 2; no-op on v5e/v6e.
        compiler_params=pltpu.CompilerParams(
            dimension_semantics=("parallel",), vmem_limit_bytes=VMEM_LIMIT),
        cost_estimate=cost2,
    )(h5, wrb)

    return out_p[:, :x_dim] if pad else out_p


def mlp_autoencoder_forward(x, prepped):
    """x: (B, ...) flattened to (B, x_dim). prepped = prepare_params(params). Returns (B, x_dim) f32."""
    b = x.shape[0]
    x2d = x.reshape(b, -1).astype(jnp.float32)
    x_dim = x2d.shape[1]
    w1b, w2b, wcdb, wd2b, wrb = prepped
    h1_dim, h2_dim = w1b.shape[1], w2b.shape[1]

    # Estimated fully-resident VMEM footprint of the fused kernel.
    fused_bytes = (b * x_dim * 4                 # x (f32)
                   + x_dim * h1_dim * 2          # w1 (bf16)
                   + h1_dim * x_dim * 2          # wr (bf16)
                   + b * x_dim * 4               # output (f32)
                   + 2 * (h1_dim * h2_dim + h2_dim * h2_dim + h2_dim * h1_dim)
                   + 4 * b * h1_dim)             # working set headroom
    if fused_bytes <= FUSED_VMEM_BUDGET:
        return _forward_fused(x2d, w1b, w2b, wcdb, wd2b, wrb)
    return _forward_split(x2d, w1b, w2b, wcdb, wd2b, wrb)


# ---------------------------------------------------------------------------
# Reference & setup
# ---------------------------------------------------------------------------
def _reference_forward(x, params):
    """Pure-JAX reference (unfolded code layer) with the same bf16-matmul / f32-acc recipe."""
    b = x.shape[0]
    w1, w2, wc, wd1, wd2, wr = params

    def dot(a, w):
        return jnp.dot(_bf16(a), _bf16(w), preferred_element_type=jnp.float32)

    h = x.reshape(b, -1)
    h = _bn_lrelu(dot(h, w1))
    h = _bn_lrelu(dot(h, w2))
    code = dot(h, wc)
    h = _bn_lrelu(dot(code, wd1))
    h = _bn_lrelu(dot(h, wd2))
    return jax.nn.sigmoid(dot(h, wr))


def init_params(key, x_dim, h_dims=(128, 64), rep_dim=32):
    """Deterministic synthetic weights, stored as (in_features, out_features)."""
    h1, h2 = h_dims
    shapes = [
        (x_dim, h1),    # encoder hidden 1
        (h1, h2),       # encoder hidden 2
        (h2, rep_dim),  # code
        (rep_dim, h2),  # decoder hidden 1
        (h2, h1),       # decoder hidden 2
        (h1, x_dim),    # reconstruction
    ]
    keys = jax.random.split(key, len(shapes))
    params = []
    for k, (fin, fout) in zip(keys, shapes):
        bound = 1.0 / jnp.sqrt(fin)  # torch.nn.Linear default U(-1/sqrt(fin), 1/sqrt(fin))
        params.append(jax.random.uniform(k, (fin, fout), jnp.float32, -bound, bound))
    return tuple(params)


if __name__ == "__main__":
    key = jax.random.PRNGKey(0)
    kx, kw = jax.random.split(key)

    # 128 independent windows of shape (16, 16) -> x_dim = 256; batch=128 gives the MXU
    # a full row dimension while the whole problem stays tiny (~400 KiB resident).
    B, H, W = 128, 16, 16
    x = jax.random.uniform(kx, (B, H, W), jnp.float32)  # sigmoid output implies data in [0,1]

    params = init_params(kw, x_dim=H * W, h_dims=(128, 64), rep_dim=32)
    prepped = prepare_params(params)       # one-time bf16 cast + wc@wd1 fold (outside the jit)

    fwd = jax.jit(mlp_autoencoder_forward)
    out = jax.block_until_ready(fwd(x, prepped))
    ref = jax.block_until_ready(_reference_forward(x, params))

    assert out.shape == (B, H * W)
    assert out.dtype == jnp.float32
    assert bool(jnp.all(jnp.isfinite(out)))
    max_diff = float(jnp.max(jnp.abs(out - ref)))
    assert max_diff < 5e-2, f"kernel/reference mismatch, max abs diff = {max_diff}"
    print("KERNEL_OK")
</pallas_src>

<mosaic_0001>
module attributes {stable_mosaic.version = 11 : i64} {
  func.func @_fused_kernel(%arg0: memref<128x256xf32, #tpu.memory_space<vmem>>, %arg1: memref<256x128xbf16, #tpu.memory_space<vmem>>, %arg2: memref<128x64xbf16, #tpu.memory_space<vmem>>, %arg3: memref<64x64xbf16, #tpu.memory_space<vmem>>, %arg4: memref<64x128xbf16, #tpu.memory_space<vmem>>, %arg5: memref<128x256xbf16, #tpu.memory_space<vmem>>, %arg6: memref<128x256xf32, #tpu.memory_space<vmem>>) attributes {dimension_semantics = [], scalar_prefetch = 0 : i64, scratch_operands = 0 : i64, tpu.core_type = #tpu.core_type<tc>} {
    %c0 = arith.constant 0 : index
    %c0_0 = arith.constant 0 : index
    %0 = vector.load %arg0[%c0, %c0_0] : memref<128x256xf32, #tpu.memory_space<vmem>>, vector<128x256xf32>
    %1 = arith.truncf %0 : vector<128x256xf32> to vector<128x256xbf16>
    %c0_1 = arith.constant 0 : index
    %c0_2 = arith.constant 0 : index
    %2 = vector.load %arg1[%c0_1, %c0_2] : memref<256x128xbf16, #tpu.memory_space<vmem>>, vector<256x128xbf16>
    %cst = arith.constant dense<0.000000e+00> : vector<128x128xf32>
    %3 = tpu.matmul %1, %2, %cst {dimension_numbers = #tpu.dot_dimension_numbers<[1], [0], [0], [1], [0, 0, 1, 1], [], []>} : vector<128x256xbf16>, vector<256x128xbf16>, vector<128x128xf32> -> vector<128x128xf32>
    %cst_3 = arith.constant dense<0.000000e+00> : vector<128xf32>
    %4 = vector.multi_reduction <add>, %3, %cst_3 [0] : vector<128x128xf32> to vector<128xf32>
    %5 = vector.shape_cast %4 : vector<128xf32> to vector<1x128xf32>
    %cst_4 = arith.constant 7.812500e-03 : f32
    %6 = vector.broadcast %cst_4 : f32 to vector<1x128xf32>
    %7 = arith.mulf %5, %6 : vector<1x128xf32>
    %8 = arith.mulf %3, %3 : vector<128x128xf32>
    %cst_5 = arith.constant dense<0.000000e+00> : vector<128xf32>
    %9 = vector.multi_reduction <add>, %8, %cst_5 [0] : vector<128x128xf32> to vector<128xf32>
    %10 = vector.shape_cast %9 : vector<128xf32> to vector<1x128xf32>
    %cst_6 = arith.constant 7.812500e-03 : f32
    %11 = vector.broadcast %cst_6 : f32 to vector<1x128xf32>
    %12 = arith.mulf %10, %11 : vector<1x128xf32>
    %13 = arith.mulf %7, %7 : vector<1x128xf32>
    %14 = arith.subf %12, %13 : vector<1x128xf32>
    %cst_7 = arith.constant 0.000000e+00 : f32
    %15 = vector.broadcast %cst_7 : f32 to vector<1x128xf32>
    %16 = arith.maximumf %14, %15 : vector<1x128xf32>
    %17 = vector.broadcast %7 : vector<1x128xf32> to vector<128x128xf32>
    %18 = arith.subf %3, %17 : vector<128x128xf32>
    %cst_8 = arith.constant 9.99999974E-5 : f32
    %19 = vector.broadcast %cst_8 : f32 to vector<1x128xf32>
    %20 = arith.addf %16, %19 : vector<1x128xf32>
    %21 = math.rsqrt %20 : vector<1x128xf32>
    %22 = vector.broadcast %21 : vector<1x128xf32> to vector<128x128xf32>
    %23 = arith.mulf %18, %22 : vector<128x128xf32>
    %cst_9 = arith.constant 0.000000e+00 : f32
    %24 = vector.broadcast %cst_9 : f32 to vector<128x128xf32>
    %25 = arith.cmpf oge, %23, %24 : vector<128x128xf32>
    %cst_10 = arith.constant 0.00999999977 : f32
    %26 = vector.broadcast %cst_10 : f32 to vector<128x128xf32>
    %27 = arith.mulf %26, %23 : vector<128x128xf32>
    %28 = arith.select %25, %23, %27 : vector<128x128xi1>, vector<128x128xf32>
    %29 = arith.truncf %28 : vector<128x128xf32> to vector<128x128xbf16>
    %c0_11 = arith.constant 0 : index
    %c0_12 = arith.constant 0 : index
    %30 = vector.load %arg2[%c0_11, %c0_12] : memref<128x64xbf16, #tpu.memory_space<vmem>>, vector<128x64xbf16>
    %cst_13 = arith.constant dense<0.000000e+00> : vector<128x64xf32>
    %31 = tpu.matmul %29, %30, %cst_13 {dimension_numbers = #tpu.dot_dimension_numbers<[1], [0], [0], [1], [0, 0, 1, 1], [], []>} : vector<128x128xbf16>, vector<128x64xbf16>, vector<128x64xf32> -> vector<128x64xf32>
    %cst_14 = arith.constant dense<0.000000e+00> : vector<64xf32>
    %32 = vector.multi_reduction <add>, %31, %cst_14 [0] : vector<128x64xf32> to vector<64xf32>
    %33 = vector.shape_cast %32 : vector<64xf32> to vector<1x64xf32>
    %cst_15 = arith.constant 7.812500e-03 : f32
    %34 = vector.broadcast %cst_15 : f32 to vector<1x64xf32>
    %35 = arith.mulf %33, %34 : vector<1x64xf32>
    %36 = arith.mulf %31, %31 : vector<128x64xf32>
    %cst_16 = arith.constant dense<0.000000e+00> : vector<64xf32>
    %37 = vector.multi_reduction <add>, %36, %cst_16 [0] : vector<128x64xf32> to vector<64xf32>
    %38 = vector.shape_cast %37 : vector<64xf32> to vector<1x64xf32>
    %cst_17 = arith.constant 7.812500e-03 : f32
    %39 = vector.broadcast %cst_17 : f32 to vector<1x64xf32>
    %40 = arith.mulf %38, %39 : vector<1x64xf32>
    %41 = arith.mulf %35, %35 : vector<1x64xf32>
    %42 = arith.subf %40, %41 : vector<1x64xf32>
    %cst_18 = arith.constant 0.000000e+00 : f32
    %43 = vector.broadcast %cst_18 : f32 to vector<1x64xf32>
    %44 = arith.maximumf %42, %43 : vector<1x64xf32>
    %45 = vector.broadcast %35 : vector<1x64xf32> to vector<128x64xf32>
    %46 = arith.subf %31, %45 : vector<128x64xf32>
    %cst_19 = arith.constant 9.99999974E-5 : f32
    %47 = vector.broadcast %cst_19 : f32 to vector<1x64xf32>
    %48 = arith.addf %44, %47 : vector<1x64xf32>
    %49 = math.rsqrt %48 : vector<1x64xf32>
    %50 = vector.broadcast %49 : vector<1x64xf32> to vector<128x64xf32>
    %51 = arith.mulf %46, %50 : vector<128x64xf32>
    %cst_20 = arith.constant 0.000000e+00 : f32
    %52 = vector.broadcast %cst_20 : f32 to vector<128x64xf32>
    %53 = arith.cmpf oge, %51, %52 : vector<128x64xf32>
    %cst_21 = arith.constant 0.00999999977 : f32
    %54 = vector.broadcast %cst_21 : f32 to vector<128x64xf32>
    %55 = arith.mulf %54, %51 : vector<128x64xf32>
    %56 = arith.select %53, %51, %55 : vector<128x64xi1>, vector<128x64xf32>
    %57 = arith.truncf %56 : vector<128x64xf32> to vector<128x64xbf16>
    %c0_22 = arith.constant 0 : index
    %c0_23 = arith.constant 0 : index
    %58 = vector.load %arg3[%c0_22, %c0_23] : memref<64x64xbf16, #tpu.memory_space<vmem>>, vector<64x64xbf16>
    %cst_24 = arith.constant dense<0.000000e+00> : vector<128x64xf32>
    %59 = tpu.matmul %57, %58, %cst_24 {dimension_numbers = #tpu.dot_dimension_numbers<[1], [0], [0], [1], [0, 0, 1, 1], [], []>} : vector<128x64xbf16>, vector<64x64xbf16>, vector<128x64xf32> -> vector<128x64xf32>
    %cst_25 = arith.constant dense<0.000000e+00> : vector<64xf32>
    %60 = vector.multi_reduction <add>, %59, %cst_25 [0] : vector<128x64xf32> to vector<64xf32>
    %61 = vector.shape_cast %60 : vector<64xf32> to vector<1x64xf32>
    %cst_26 = arith.constant 7.812500e-03 : f32
    %62 = vector.broadcast %cst_26 : f32 to vector<1x64xf32>
    %63 = arith.mulf %61, %62 : vector<1x64xf32>
    %64 = arith.mulf %59, %59 : vector<128x64xf32>
    %cst_27 = arith.constant dense<0.000000e+00> : vector<64xf32>
    %65 = vector.multi_reduction <add>, %64, %cst_27 [0] : vector<128x64xf32> to vector<64xf32>
    %66 = vector.shape_cast %65 : vector<64xf32> to vector<1x64xf32>
    %cst_28 = arith.constant 7.812500e-03 : f32
    %67 = vector.broadcast %cst_28 : f32 to vector<1x64xf32>
    %68 = arith.mulf %66, %67 : vector<1x64xf32>
    %69 = arith.mulf %63, %63 : vector<1x64xf32>
    %70 = arith.subf %68, %69 : vector<1x64xf32>
    %cst_29 = arith.constant 0.000000e+00 : f32
    %71 = vector.broadcast %cst_29 : f32 to vector<1x64xf32>
    %72 = arith.maximumf %70, %71 : vector<1x64xf32>
    %73 = vector.broadcast %63 : vector<1x64xf32> to vector<128x64xf32>
    %74 = arith.subf %59, %73 : vector<128x64xf32>
    %cst_30 = arith.constant 9.99999974E-5 : f32
    %75 = vector.broadcast %cst_30 : f32 to vector<1x64xf32>
    %76 = arith.addf %72, %75 : vector<1x64xf32>
    %77 = math.rsqrt %76 : vector<1x64xf32>
    %78 = vector.broadcast %77 : vector<1x64xf32> to vector<128x64xf32>
    %79 = arith.mulf %74, %78 : vector<128x64xf32>
    %cst_31 = arith.constant 0.000000e+00 : f32
    %80 = vector.broadcast %cst_31 : f32 to vector<128x64xf32>
    %81 = arith.cmpf oge, %79, %80 : vector<128x64xf32>
    %cst_32 = arith.constant 0.00999999977 : f32
    %82 = vector.broadcast %cst_32 : f32 to vector<128x64xf32>
    %83 = arith.mulf %82, %79 : vector<128x64xf32>
    %84 = arith.select %81, %79, %83 : vector<128x64xi1>, vector<128x64xf32>
    %85 = arith.truncf %84 : vector<128x64xf32> to vector<128x64xbf16>
    %c0_33 = arith.constant 0 : index
    %c0_34 = arith.constant 0 : index
    %86 = vector.load %arg4[%c0_33, %c0_34] : memref<64x128xbf16, #tpu.memory_space<vmem>>, vector<64x128xbf16>
    %cst_35 = arith.constant dense<0.000000e+00> : vector<128x128xf32>
    %87 = tpu.matmul %85, %86, %cst_35 {dimension_numbers = #tpu.dot_dimension_numbers<[1], [0], [0], [1], [0, 0, 1, 1], [], []>} : vector<128x64xbf16>, vector<64x128xbf16>, vector<128x128xf32> -> vector<128x128xf32>
    %cst_36 = arith.constant dense<0.000000e+00> : vector<128xf32>
    %88 = vector.multi_reduction <add>, %87, %cst_36 [0] : vector<128x128xf32> to vector<128xf32>
    %89 = vector.shape_cast %88 : vector<128xf32> to vector<1x128xf32>
    %cst_37 = arith.constant 7.812500e-03 : f32
    %90 = vector.broadcast %cst_37 : f32 to vector<1x128xf32>
    %91 = arith.mulf %89, %90 : vector<1x128xf32>
    %92 = arith.mulf %87, %87 : vector<128x128xf32>
    %cst_38 = arith.constant dense<0.000000e+00> : vector<128xf32>
    %93 = vector.multi_reduction <add>, %92, %cst_38 [0] : vector<128x128xf32> to vector<128xf32>
    %94 = vector.shape_cast %93 : vector<128xf32> to vector<1x128xf32>
    %cst_39 = arith.constant 7.812500e-03 : f32
    %95 = vector.broadcast %cst_39 : f32 to vector<1x128xf32>
    %96 = arith.mulf %94, %95 : vector<1x128xf32>
    %97 = arith.mulf %91, %91 : vector<1x128xf32>
    %98 = arith.subf %96, %97 : vector<1x128xf32>
    %cst_40 = arith.constant 0.000000e+00 : f32
    %99 = vector.broadcast %cst_40 : f32 to vector<1x128xf32>
    %100 = arith.maximumf %98, %99 : vector<1x128xf32>
    %101 = vector.broadcast %91 : vector<1x128xf32> to vector<128x128xf32>
    %102 = arith.subf %87, %101 : vector<128x128xf32>
    %cst_41 = arith.constant 9.99999974E-5 : f32
    %103 = vector.broadcast %cst_41 : f32 to vector<1x128xf32>
    %104 = arith.addf %100, %103 : vector<1x128xf32>
    %105 = math.rsqrt %104 : vector<1x128xf32>
    %106 = vector.broadcast %105 : vector<1x128xf32> to vector<128x128xf32>
    %107 = arith.mulf %102, %106 : vector<128x128xf32>
    %cst_42 = arith.constant 0.000000e+00 : f32
    %108 = vector.broadcast %cst_42 : f32 to vector<128x128xf32>
    %109 = arith.cmpf oge, %107, %108 : vector<128x128xf32>
    %cst_43 = arith.constant 0.00999999977 : f32
    %110 = vector.broadcast %cst_43 : f32 to vector<128x128xf32>
    %111 = arith.mulf %110, %107 : vector<128x128xf32>
    %112 = arith.select %109, %107, %111 : vector<128x128xi1>, vector<128x128xf32>
    %113 = arith.truncf %112 : vector<128x128xf32> to vector<128x128xbf16>
    %c0_44 = arith.constant 0 : index
    %c0_45 = arith.constant 0 : index
    %114 = vector.load %arg5[%c0_44, %c0_45] : memref<128x256xbf16, #tpu.memory_space<vmem>>, vector<128x256xbf16>
    %cst_46 = arith.constant dense<0.000000e+00> : vector<128x256xf32>
    %115 = tpu.matmul %113, %114, %cst_46 {dimension_numbers = #tpu.dot_dimension_numbers<[1], [0], [0], [1], [0, 0, 1, 1], [], []>} : vector<128x128xbf16>, vector<128x256xbf16>, vector<128x256xf32> -> vector<128x256xf32>
    %116 = arith.negf %115 : vector<128x256xf32>
    %117 = math.exp %116 : vector<128x256xf32>
    %cst_47 = arith.constant 1.000000e+00 : f32
    %118 = vector.broadcast %cst_47 : f32 to vector<128x256xf32>
    %119 = arith.addf %118, %117 : vector<128x256xf32>
    %120 = arith.divf %118, %119 : vector<128x256xf32>
    %c0_48 = arith.constant 0 : index
    %c0_49 = arith.constant 0 : index
    %121 = vector.load %arg6[%c0_48, %c0_49] : memref<128x256xf32, #tpu.memory_space<vmem>>, vector<128x256xf32>
    tpu.vector_store %arg6[%c0_48, %c0_49], %120 {strides = array<i32>} : memref<128x256xf32, #tpu.memory_space<vmem>>, vector<128x256xf32>,
    return
  }
}

</mosaic_0001>

<llo_original>
// kernel: mlp_autoencoder_forward.1
$region0: #{mlp_autoencoder_forward.1}
  #allocation0 [shape = 'u32[]', space=smem, size = 0x4, offset = 0x4, fixed_abs, tag = 'smem constant byte address 0x4 - core index']
  #allocation1 [shape = 'u32[144,128]{1,0:T(1,128)}', space=vmem, size = 0x12000, scoped, tag = 'internal scratch']
  %s0 = inlined_call_operand.vmem [shape: f32[128,256], index: 0, kind: input, shape index: {}]
  %s1 = inlined_call_operand.vmem [shape: bf16[256,128], index: 1, kind: input, shape index: {}]
  %s2 = inlined_call_operand.vmem [shape: bf16[128,64], index: 2, kind: input, shape index: {}]
  %s3 = inlined_call_operand.vmem [shape: bf16[64,64], index: 3, kind: input, shape index: {}]
  %s4 = inlined_call_operand.vmem [shape: bf16[64,128], index: 4, kind: input, shape index: {}]
  %s5 = inlined_call_operand.vmem [shape: bf16[128,256], index: 5, kind: input, shape index: {}]
  %s6 = inlined_call_operand.hbm [shape: f32[128,256], index: 6, kind: output, shape index: {}]
  %s7 = sld [smem:[#allocation0]]
  $region34: #{mlp_autoencoder_forward.1} parent=0
    _
  %s9 = ssub.s32 1, %s7
  %s10 = scalar_select 0, %s9, %s7
  $region1: #{mlp_autoencoder_forward.1} parent=0
    #allocation2 [shape = 'u8[131072]{0}', space=vmem, size = 0x20000, scoped, tag = 'output window, operand 0, single buffered']
    #allocation3 [shape = 's32[1]{0}', space=sflag, size = 0x4, scoped, tag = 'scoped memory for mlp_autoencoder_forward.1']
    %11 = vsyncpa [#allocation3], 0
    // Predicated region
    $region2: #{mlp_autoencoder_forward.1} parent=1 // pred_check
      _
    $region3: #{mlp_autoencoder_forward.1} parent=1 // pred_check_branch
      %13 = sbr.rel (0) target = $region5
    $region4: #{mlp_autoencoder_forward.1} parent=1 // pred_region
      _
    $region5: #{mlp_autoencoder_forward.1} parent=1 // pred_fallthru
      _
    // Predicated region
    $region6: #{mlp_autoencoder_forward.1} parent=1 // pred_check
      _
    $region7: #{mlp_autoencoder_forward.1} parent=1 // pred_check_branch
      %15 = sbr.rel (0) target = $region9
    $region8: #{mlp_autoencoder_forward.1} parent=1 // pred_region
      _
    $region9: #{mlp_autoencoder_forward.1} parent=1 // pred_fallthru
      _
    // Predicated region
    $region10: #{mlp_autoencoder_forward.1} parent=1 // pred_check
      _
    $region11: #{mlp_autoencoder_forward.1} parent=1 // pred_check_branch
      %17 = sbr.rel (0) target = $region13
    $region12: #{mlp_autoencoder_forward.1} parent=1 // pred_region
      _
    $region13: #{mlp_autoencoder_forward.1} parent=1 // pred_fallthru
      _
    // Predicated region
    $region14: #{mlp_autoencoder_forward.1} parent=1 // pred_check
      _
    $region15: #{mlp_autoencoder_forward.1} parent=1 // pred_check_branch
      %19 = sbr.rel (0) target = $region17
    $region16: #{mlp_autoencoder_forward.1} parent=1 // pred_region
      _
    $region17: #{mlp_autoencoder_forward.1} parent=1 // pred_fallthru
      _
    // Predicated region
    $region18: #{mlp_autoencoder_forward.1} parent=1 // pred_check
      _
    $region19: #{mlp_autoencoder_forward.1} parent=1 // pred_check_branch
      %21 = sbr.rel (0) target = $region21
    $region20: #{mlp_autoencoder_forward.1} parent=1 // pred_region
      _
    $region21: #{mlp_autoencoder_forward.1} parent=1 // pred_fallthru
      _
    // Predicated region
    $region22: #{mlp_autoencoder_forward.1} parent=1 // pred_check
      _
    $region23: #{mlp_autoencoder_forward.1} parent=1 // pred_check_branch
      %23 = sbr.rel (0) target = $region25
    $region24: #{mlp_autoencoder_forward.1} parent=1 // pred_region
      _
    $region25: #{mlp_autoencoder_forward.1} parent=1 // pred_fallthru
      _
    %v25 = vld [vmem:[%s0] sm:$0xff]
    %v26 = vld [vmem:[%s0 + $0x8] sm:$0xff]
    %v27 = vld [vmem:[%s0 + $0x10] sm:$0xff]
    %v28 = vld [vmem:[%s0 + $0x18] sm:$0xff]
    %v29 = vld [vmem:[%s0 + $0x20] sm:$0xff]
    %v30 = vld [vmem:[%s0 + $0x28] sm:$0xff]
    %v31 = vld [vmem:[%s0 + $0x30] sm:$0xff]
    %v32 = vld [vmem:[%s0 + $0x38] sm:$0xff]
    %v33 = vld [vmem:[%s0 + $0x40] sm:$0xff]
    %v34 = vld [vmem:[%s0 + $0x48] sm:$0xff]
    %v35 = vld [vmem:[%s0 + $0x50] sm:$0xff]
    %v36 = vld [vmem:[%s0 + $0x58] sm:$0xff]
    %v37 = vld [vmem:[%s0 + $0x60] sm:$0xff]
    %v38 = vld [vmem:[%s0 + $0x68] sm:$0xff]
    %v39 = vld [vmem:[%s0 + $0x70] sm:$0xff]
    %v40 = vld [vmem:[%s0 + $0x78] sm:$0xff]
    %v41 = vld [vmem:[%s0 + $0x80] sm:$0xff]
    %v42 = vld [vmem:[%s0 + $0x88] sm:$0xff]
    %v43 = vld [vmem:[%s0 + $0x90] sm:$0xff]
    %v44 = vld [vmem:[%s0 + $0x98] sm:$0xff]
    %v45 = vld [vmem:[%s0 + $0xa0] sm:$0xff]
    %v46 = vld [vmem:[%s0 + $0xa8] sm:$0xff]
    %v47 = vld [vmem:[%s0 + $0xb0] sm:$0xff]
    %v48 = vld [vmem:[%s0 + $0xb8] sm:$0xff]
    %v49 = vld [vmem:[%s0 + $0xc0] sm:$0xff]
    %v50 = vld [vmem:[%s0 + $0xc8] sm:$0xff]
    %v51 = vld [vmem:[%s0 + $0xd0] sm:$0xff]
    %v52 = vld [vmem:[%s0 + $0xd8] sm:$0xff]
    %v53 = vld [vmem:[%s0 + $0xe0] sm:$0xff]
    %v54 = vld [vmem:[%s0 + $0xe8] sm:$0xff]
    %v55 = vld [vmem:[%s0 + $0xf0] sm:$0xff]
    %v56 = vld [vmem:[%s0 + $0xf8] sm:$0xff]
    %v57 = vpack.c.bf16 %v27, %v25
    %v58 = vpack.c.bf16 %v28, %v26
    %v59 = vpack.c.bf16 %v31, %v29
    %v60 = vpack.c.bf16 %v32, %v30
    %v61 = vpack.c.bf16 %v35, %v33
    %v62 = vpack.c.bf16 %v36, %v34
    %v63 = vpack.c.bf16 %v39, %v37
    %v64 = vpack.c.bf16 %v40, %v38
    %v65 = vpack.c.bf16 %v43, %v41
    %v66 = vpack.c.bf16 %v44, %v42
    %v67 = vpack.c.bf16 %v47, %v45
    %v68 = vpack.c.bf16 %v48, %v46
    %v69 = vpack.c.bf16 %v51, %v49
    %v70 = vpack.c.bf16 %v52, %v50
    %v71 = vpack.c.bf16 %v55, %v53
    %v72 = vpack.c.bf16 %v56, %v54
    %v73 = vld [vmem:[%s1] sm:$0xf]
    %v74 = vld [vmem:[%s1 + $0x4] sm:$0xf]
    %v75 = vld [vmem:[%s1 + $0x8] sm:$0xf]
    %v76 = vld [vmem:[%s1 + $0xc] sm:$0xf]
    %v77 = vld [vmem:[%s1 + $0x10] sm:$0xf]
    %v78 = vld [vmem:[%s1 + $0x14] sm:$0xf]
    %v79 = vld [vmem:[%s1 + $0x18] sm:$0xf]
    %v80 = vld [vmem:[%s1 + $0x1c] sm:$0xf]
    %v81 = vld [vmem:[%s1 + $0x20] sm:$0xf]
    %v82 = vld [vmem:[%s1 + $0x24] sm:$0xf]
    %v83 = vld [vmem:[%s1 + $0x28] sm:$0xf]
    %v84 = vld [vmem:[%s1 + $0x2c] sm:$0xf]
    %v85 = vld [vmem:[%s1 + $0x30] sm:$0xf]
    %v86 = vld [vmem:[%s1 + $0x34] sm:$0xf]
    %v87 = vld [vmem:[%s1 + $0x38] sm:$0xf]
    %v88 = vld [vmem:[%s1 + $0x3c] sm:$0xf]
    %v89 = vld [vmem:[%s1 + $0x40] sm:$0xf]
    %v90 = vld [vmem:[%s1 + $0x44] sm:$0xf]
    %v91 = vld [vmem:[%s1 + $0x48] sm:$0xf]
    %v92 = vld [vmem:[%s1 + $0x4c] sm:$0xf]
    %v93 = vld [vmem:[%s1 + $0x50] sm:$0xf]
    %v94 = vld [vmem:[%s1 + $0x54] sm:$0xf]
    %v95 = vld [vmem:[%s1 + $0x58] sm:$0xf]
    %v96 = vld [vmem:[%s1 + $0x5c] sm:$0xf]
    %v97 = vld [vmem:[%s1 + $0x60] sm:$0xf]
    %v98 = vld [vmem:[%s1 + $0x64] sm:$0xf]
    %v99 = vld [vmem:[%s1 + $0x68] sm:$0xf]
    %v100 = vld [vmem:[%s1 + $0x6c] sm:$0xf]
    %v101 = vld [vmem:[%s1 + $0x70] sm:$0xf]
    %v102 = vld [vmem:[%s1 + $0x74] sm:$0xf]
    %v103 = vld [vmem:[%s1 + $0x78] sm:$0xf]
    %v104 = vld [vmem:[%s1 + $0x7c] sm:$0xf]
    %v137 = vunpack.c.l.b16 %v73
    %v138 = vunpack.c.l.b16 %v74
    %v139 = vunpack.c.l.b16 %v75
    %v140 = vunpack.c.l.b16 %v76
    %v141 = vunpack.c.l.b16 %v77
    %v142 = vunpack.c.l.b16 %v78
    %v143 = vunpack.c.l.b16 %v79
    %v144 = vunpack.c.l.b16 %v80
    %v145 = vunpack.c.l.b16 %v81
    %v146 = vunpack.c.l.b16 %v82
    %v147 = vunpack.c.l.b16 %v83
    %v148 = vunpack.c.l.b16 %v84
    %v149 = vunpack.c.l.b16 %v85
    %v150 = vunpack.c.l.b16 %v86
    %v151 = vunpack.c.l.b16 %v87
    %v152 = vunpack.c.l.b16 %v88
    %v153 = vunpack.c.l.b16 %v89
    %v154 = vunpack.c.l.b16 %v90
    %v155 = vunpack.c.l.b16 %v91
    %v156 = vunpack.c.l.b16 %v92
    %v157 = vunpack.c.l.b16 %v93
    %v158 = vunpack.c.l.b16 %v94
    %v159 = vunpack.c.l.b16 %v95
    %v160 = vunpack.c.l.b16 %v96
    %v161 = vunpack.c.l.b16 %v97
    %v162 = vunpack.c.l.b16 %v98
    %v163 = vunpack.c.l.b16 %v99
    %v164 = vunpack.c.l.b16 %v100
    %v165 = vunpack.c.l.b16 %v101
    %v166 = vunpack.c.l.b16 %v102
    %v167 = vunpack.c.l.b16 %v103
    %v168 = vunpack.c.l.b16 %v104
    %v169 = vpack.c.b16 %v138, %v137
    %v170 = vpack.c.b16 %v140, %v139
    %v171 = vpack.c.b16 %v142, %v141
    %v172 = vpack.c.b16 %v144, %v143
    %v173 = vpack.c.b16 %v146, %v145
    %v174 = vpack.c.b16 %v148, %v147
    %v175 = vpack.c.b16 %v150, %v149
    %v176 = vpack.c.b16 %v152, %v151
    %v177 = vpack.c.b16 %v154, %v153
    %v178 = vpack.c.b16 %v156, %v155
    %v179 = vpack.c.b16 %v158, %v157
    %v180 = vpack.c.b16 %v160, %v159
    %v181 = vpack.c.b16 %v162, %v161
    %v182 = vpack.c.b16 %v164, %v163
    %v183 = vpack.c.b16 %v166, %v165
    %v184 = vpack.c.b16 %v168, %v167
    %201 = vmatprep.subr.bf16.mxu0 0
    %202 = vmatpush1.bf16.msra.mxu0 %v176
    %203 = vmatprep.subr.bf16.mxu0 0
    %204 = vmatpush1.bf16.msra.mxu0 %v175
    %205 = vmatprep.subr.bf16.mxu0 0
    %206 = vmatpush1.bf16.msra.mxu0 %v174
    %207 = vmatprep.subr.bf16.mxu0 0
    %208 = vmatpush1.bf16.msra.mxu0 %v173
    %209 = vmatprep.subr.bf16.mxu0 0
    %210 = vmatpush1.bf16.msra.mxu0 %v172
    %211 = vmatprep.subr.bf16.mxu0 0
    %212 = vmatpush1.bf16.msra.mxu0 %v171
    %213 = vmatprep.subr.bf16.mxu0 0
    %214 = vmatpush1.bf16.msra.mxu0 %v170
    %215 = vmatprep.subr.bf16.mxu0 0
    %216 = vmatpush1.bf16.msra.mxu0 %v169
    %217 = vmatprep.subr.bf16.mxu0 0
    %218 = vmatpush2.bf16.msra.mxu0 %v184
    %219 = vmatprep.subr.bf16.mxu0 0
    %220 = vmatpush2.bf16.msra.mxu0 %v183
    %221 = vmatprep.subr.bf16.mxu0 0
    %222 = vmatpush2.bf16.msra.mxu0 %v182
    %223 = vmatprep.subr.bf16.mxu0 0
    %224 = vmatpush2.bf16.msra.mxu0 %v181
    %225 = vmatprep.subr.bf16.mxu0 0
    %226 = vmatpush2.bf16.msra.mxu0 %v180
    %227 = vmatprep.subr.bf16.mxu0 0
    %228 = vmatpush2.bf16.msra.mxu0 %v179
    %229 = vmatprep.subr.bf16.mxu0 0
    %230 = vmatpush2.bf16.msra.mxu0 %v178
    %231 = vmatprep.subr.bf16.mxu0 0
    %232 = vmatpush2.bf16.msra.mxu0 %v177
    %233 = vmatprep.mubr.bf16.mxu0 %v58
    %234 = vmatmul.mubr.bf16.gmra.mxu0 %v57
    %v235 = vpop.f32.mrf.mxu0
    %v236 = vadd.f32 0.0, %v235
    %v237 = vpop.f32.mrf.mxu0
    %v238 = vpop.f32.mrf.mxu0
    %v239 = vadd.f32 0.0, %v238
    %v240 = vpop.f32.mrf.mxu0
    %241 = vmatprep.mubr.bf16.mxu0 %v60
    %242 = vmatmul.mubr.bf16.gmra.mxu0 %v59
    %v243 = vpop.f32.mrf.mxu0
    %v244 = vadd.f32 0.0, %v243
    %v245 = vpop.f32.mrf.mxu0
    %v246 = vpop.f32.mrf.mxu0
    %v247 = vadd.f32 0.0, %v246
    %v248 = vpop.f32.mrf.mxu0
    %249 = vmatprep.mubr.bf16.mxu0 %v62
    %250 = vmatmul.mubr.bf16.gmra.mxu0 %v61
    %v251 = vpop.f32.mrf.mxu0
    %v252 = vadd.f32 0.0, %v251
    %v253 = vpop.f32.mrf.mxu0
    %v254 = vpop.f32.mrf.mxu0
    %v255 = vadd.f32 0.0, %v254
    %v256 = vpop.f32.mrf.mxu0
    %257 = vmatprep.mubr.bf16.mxu0 %v64
    %258 = vmatmul.mubr.bf16.gmra.mxu0 %v63
    %v259 = vpop.f32.mrf.mxu0
    %v260 = vadd.f32 0.0, %v259
    %v261 = vpop.f32.mrf.mxu0
    %v262 = vpop.f32.mrf.mxu0
    %v263 = vadd.f32 0.0, %v262
    %v264 = vpop.f32.mrf.mxu0
    %265 = vmatprep.mubr.bf16.mxu0 %v66
    %266 = vmatmul.mubr.bf16.gmra.mxu0 %v65
    %v267 = vpop.f32.mrf.mxu0
    %v268 = vadd.f32 0.0, %v267
    %v269 = vpop.f32.mrf.mxu0
    %v270 = vpop.f32.mrf.mxu0
    %v271 = vadd.f32 0.0, %v270
    %v272 = vpop.f32.mrf.mxu0
    %273 = vmatprep.mubr.bf16.mxu0 %v68
    %274 = vmatmul.mubr.bf16.gmra.mxu0 %v67
    %v275 = vpop.f32.mrf.mxu0
    %v276 = vadd.f32 0.0, %v275
    %v277 = vpop.f32.mrf.mxu0
    %v278 = vpop.f32.mrf.mxu0
    %v279 = vadd.f32 0.0, %v278
    %v280 = vpop.f32.mrf.mxu0
    %281 = vmatprep.mubr.bf16.mxu0 %v70
    %282 = vmatmul.mubr.bf16.gmra.mxu0 %v69
    %v283 = vpop.f32.mrf.mxu0
    %v284 = vadd.f32 0.0, %v283
    %v285 = vpop.f32.mrf.mxu0
    %v286 = vpop.f32.mrf.mxu0
    %v287 = vadd.f32 0.0, %v286
    %v288 = vpop.f32.mrf.mxu0
    %289 = vmatprep.mubr.bf16.mxu0 %v72
    %290 = vmatmul.mubr.bf16.gmra.mxu0 %v71
    %v291 = vpop.f32.mrf.mxu0
    %v292 = vadd.f32 0.0, %v291
    %v293 = vpop.f32.mrf.mxu0
    %v294 = vpop.f32.mrf.mxu0
    %v295 = vadd.f32 0.0, %v294
    %v296 = vpop.f32.mrf.mxu0
    %297 = vdwg.mxu0
    %v298 = vadd.f32 %v236, %v239
    %v299 = vadd.f32 %v298, %v244
    %v300 = vadd.f32 %v299, %v247
    %v301 = vadd.f32 %v300, %v252
    %v302 = vadd.f32 %v301, %v255
    %v303 = vadd.f32 %v302, %v260
    %v304 = vadd.f32 %v303, %v263
    %v305 = vadd.f32 %v304, %v268
    %v306 = vadd.f32 %v305, %v271
    %v307 = vadd.f32 %v306, %v276
    %v308 = vadd.f32 %v307, %v279
    %v309 = vadd.f32 %v308, %v284
    %v310 = vadd.f32 %v309, %v287
    %v311 = vadd.f32 %v310, %v292
    %v312 = vadd.f32 %v311, %v295
    %v313 = vrot.slane %v312, 4
    %v314 = vadd.f32 %v312, %v313
    %v315 = vrot.slane %v314, 2
    %v316 = vadd.f32 %v314, %v315
    %v317 = vrot.slane %v316, 1
    %v318 = vadd.f32 %v316, %v317
    %v319 = vmul.f32 %v318, 0.0078125
    %v320 = vmul.f32 %v236, %v236
    %v321 = vmul.f32 %v239, %v239
    %v322 = vmul.f32 %v244, %v244
    %v323 = vmul.f32 %v247, %v247
    %v324 = vmul.f32 %v252, %v252
    %v325 = vmul.f32 %v255, %v255
    %v326 = vmul.f32 %v260, %v260
    %v327 = vmul.f32 %v263, %v263
    %v328 = vmul.f32 %v268, %v268
    %v329 = vmul.f32 %v271, %v271
    %v330 = vmul.f32 %v276, %v276
    %v331 = vmul.f32 %v279, %v279
    %v332 = vmul.f32 %v284, %v284
    %v333 = vmul.f32 %v287, %v287
    %v334 = vmul.f32 %v292, %v292
    %v335 = vmul.f32 %v295, %v295
    %v336 = vadd.f32 %v320, %v321
    %v337 = vadd.f32 %v336, %v322
    %v338 = vadd.f32 %v337, %v323
    %v339 = vadd.f32 %v338, %v324
    %v340 = vadd.f32 %v339, %v325
    %v341 = vadd.f32 %v340, %v326
    %v342 = vadd.f32 %v341, %v327
    %v343 = vadd.f32 %v342, %v328
    %v344 = vadd.f32 %v343, %v329
    %v345 = vadd.f32 %v344, %v330
    %v346 = vadd.f32 %v345, %v331
    %v347 = vadd.f32 %v346, %v332
    %v348 = vadd.f32 %v347, %v333
    %v349 = vadd.f32 %v348, %v334
    %v350 = vadd.f32 %v349, %v335
    %v351 = vrot.slane %v350, 4
    %v352 = vadd.f32 %v350, %v351
    %v353 = vrot.slane %v352, 2
    %v354 = vadd.f32 %v352, %v353
    %v355 = vrot.slane %v354, 1
    %v356 = vadd.f32 %v354, %v355
    %v357 = vmul.f32 %v356, 0.0078125
    %v358 = vmul.f32 %v319, %v319
    %v359 = vsub.f32 %v357, %v358
    %v360 = vmax.f32 %v359, 0.0
    %v361 = vsub.f32 %v236, %v319
    %v362 = vsub.f32 %v239, %v319
    %v363 = vsub.f32 %v244, %v319
    %v364 = vsub.f32 %v247, %v319
    %v365 = vsub.f32 %v252, %v319
    %v366 = vsub.f32 %v255, %v319
    %v367 = vsub.f32 %v260, %v319
    %v368 = vsub.f32 %v263, %v319
    %v369 = vsub.f32 %v268, %v319
    %v370 = vsub.f32 %v271, %v319
    %v371 = vsub.f32 %v276, %v319
    %v372 = vsub.f32 %v279, %v319
    %v373 = vsub.f32 %v284, %v319
    %v374 = vsub.f32 %v287, %v319
    %v375 = vsub.f32 %v292, %v319
    %v376 = vsub.f32 %v295, %v319
    %v377 = vadd.f32 %v360, 0.0001
    %v378 = vrsqrt.pop %v377
    %v379 = vmul.f32 %v361, %v378
    %v380 = vmul.f32 %v362, %v378
    %v381 = vmul.f32 %v363, %v378
    %v382 = vmul.f32 %v364, %v378
    %v383 = vmul.f32 %v365, %v378
    %v384 = vmul.f32 %v366, %v378
    %v385 = vmul.f32 %v367, %v378
    %v386 = vmul.f32 %v368, %v378
    %v387 = vmul.f32 %v369, %v378
    %v388 = vmul.f32 %v370, %v378
    %v389 = vmul.f32 %v371, %v378
    %v390 = vmul.f32 %v372, %v378
    %v391 = vmul.f32 %v373, %v378
    %v392 = vmul.f32 %v374, %v378
    %v393 = vmul.f32 %v375, %v378
    %v394 = vmul.f32 %v376, %v378
    %vm395 = vcmp.ge.f32.partialorder %v379, 0.0
    %vm396 = vcmp.ge.f32.partialorder %v380, 0.0
    %vm397 = vcmp.ge.f32.partialorder %v381, 0.0
    %vm398 = vcmp.ge.f32.partialorder %v382, 0.0
    %vm399 = vcmp.ge.f32.partialorder %v383, 0.0
    %vm400 = vcmp.ge.f32.partialorder %v384, 0.0
    %vm401 = vcmp.ge.f32.partialorder %v385, 0.0
    %vm402 = vcmp.ge.f32.partialorder %v386, 0.0
    %vm403 = vcmp.ge.f32.partialorder %v387, 0.0
    %vm404 = vcmp.ge.f32.partialorder %v388, 0.0
    %vm405 = vcmp.ge.f32.partialorder %v389, 0.0
    %vm406 = vcmp.ge.f32.partialorder %v390, 0.0
    %vm407 = vcmp.ge.f32.partialorder %v391, 0.0
    %vm408 = vcmp.ge.f32.partialorder %v392, 0.0
    %vm409 = vcmp.ge.f32.partialorder %v393, 0.0
    %vm410 = vcmp.ge.f32.partialorder %v394, 0.0
    %v411 = vmul.f32 %v379, 0.01
    %v412 = vmul.f32 %v380, 0.01
    %v413 = vmul.f32 %v381, 0.01
    %v414 = vmul.f32 %v382, 0.01
    %v415 = vmul.f32 %v383, 0.01
    %v416 = vmul.f32 %v384, 0.01
    %v417 = vmul.f32 %v385, 0.01
    %v418 = vmul.f32 %v386, 0.01
    %v419 = vmul.f32 %v387, 0.01
    %v420 = vmul.f32 %v388, 0.01
    %v421 = vmul.f32 %v389, 0.01
    %v422 = vmul.f32 %v390, 0.01
    %v423 = vmul.f32 %v391, 0.01
    %v424 = vmul.f32 %v392, 0.01
    %v425 = vmul.f32 %v393, 0.01
    %v426 = vmul.f32 %v394, 0.01
    %v427 = vsel %vm395, %v379, %v411
    %v428 = vsel %vm396, %v380, %v412
    %v429 = vsel %vm397, %v381, %v413
    %v430 = vsel %vm398, %v382, %v414
    %v431 = vsel %vm399, %v383, %v415
    %v432 = vsel %vm400, %v384, %v416
    %v433 = vsel %vm401, %v385, %v417
    %v434 = vsel %vm402, %v386, %v418
    %v435 = vsel %vm403, %v387, %v419
    %v436 = vsel %vm404, %v388, %v420
    %v437 = vsel %vm405, %v389, %v421
    %v438 = vsel %vm406, %v390, %v422
    %v439 = vsel %vm407, %v391, %v423
    %v440 = vsel %vm408, %v392, %v424
    %v441 = vsel %vm409, %v393, %v425
    %v442 = vsel %vm410, %v394, %v426
    %v443 = vpack.c.bf16 %v428, %v427
    %v444 = vpack.c.bf16 %v430, %v429
    %v445 = vpack.c.bf16 %v432, %v431
    %v446 = vpack.c.bf16 %v434, %v433
    %v447 = vpack.c.bf16 %v436, %v435
    %v448 = vpack.c.bf16 %v438, %v437
    %v449 = vpack.c.bf16 %v440, %v439
    %v450 = vpack.c.bf16 %v442, %v441
    %v451 = vld [vmem:[%s2] sm:$0xf]
    %v452 = vld [vmem:[%s2 + $0x4] sm:$0xf]
    %v453 = vld [vmem:[%s2 + $0x8] sm:$0xf]
    %v454 = vld [vmem:[%s2 + $0xc] sm:$0xf]
    %v455 = vld [vmem:[%s2 + $0x10] sm:$0xf]
    %v456 = vld [vmem:[%s2 + $0x14] sm:$0xf]
    %v457 = vld [vmem:[%s2 + $0x18] sm:$0xf]
    %v458 = vld [vmem:[%s2 + $0x1c] sm:$0xf]
    %v459 = vld [vmem:[%s2 + $0x20] sm:$0xf]
    %v460 = vld [vmem:[%s2 + $0x24] sm:$0xf]
    %v461 = vld [vmem:[%s2 + $0x28] sm:$0xf]
    %v462 = vld [vmem:[%s2 + $0x2c] sm:$0xf]
    %v463 = vld [vmem:[%s2 + $0x30] sm:$0xf]
    %v464 = vld [vmem:[%s2 + $0x34] sm:$0xf]
    %v465 = vld [vmem:[%s2 + $0x38] sm:$0xf]
    %v466 = vld [vmem:[%s2 + $0x3c] sm:$0xf]
    %v483 = vunpack.c.l.b16 %v451
    %v484 = vunpack.c.l.b16 %v452
    %v485 = vunpack.c.l.b16 %v453
    %v486 = vunpack.c.l.b16 %v454
    %v487 = vunpack.c.l.b16 %v455
    %v488 = vunpack.c.l.b16 %v456
    %v489 = vunpack.c.l.b16 %v457
    %v490 = vunpack.c.l.b16 %v458
    %v491 = vunpack.c.l.b16 %v459
    %v492 = vunpack.c.l.b16 %v460
    %v493 = vunpack.c.l.b16 %v461
    %v494 = vunpack.c.l.b16 %v462
    %v495 = vunpack.c.l.b16 %v463
    %v496 = vunpack.c.l.b16 %v464
    %v497 = vunpack.c.l.b16 %v465
    %v498 = vunpack.c.l.b16 %v466
    %v499 = vpack.c.b16 %v484, %v483
    %v500 = vpack.c.b16 %v486, %v485
    %v501 = vpack.c.b16 %v488, %v487
    %v502 = vpack.c.b16 %v490, %v489
    %v503 = vpack.c.b16 %v492, %v491
    %v504 = vpack.c.b16 %v494, %v493
    %v505 = vpack.c.b16 %v496, %v495
    %v506 = vpack.c.b16 %v498, %v497
    %515 = vmatprep.subr.bf16.mxu0 0
    %516 = vmatpush1.bf16.msra.mxu0 %v506
    %517 = vmatprep.subr.bf16.mxu0 0
    %518 = vmatpush1.bf16.msra.mxu0 %v505
    %519 = vmatprep.subr.bf16.mxu0 0
    %520 = vmatpush1.bf16.msra.mxu0 %v504
    %521 = vmatprep.subr.bf16.mxu0 0
    %522 = vmatpush1.bf16.msra.mxu0 %v503
    %523 = vmatprep.subr.bf16.mxu0 0
    %524 = vmatpush1.bf16.msra.mxu0 %v502
    %525 = vmatprep.subr.bf16.mxu0 0
    %526 = vmatpush1.bf16.msra.mxu0 %v501
    %527 = vmatprep.subr.bf16.mxu0 0
    %528 = vmatpush1.bf16.msra.mxu0 %v500
    %529 = vmatprep.subr.bf16.mxu0 0
    %530 = vmatpush1.bf16.msra.mxu0 %v499
    %531 = vmatprep.subr.bf16.mxu0 0
    %532 = vmatpush2.bf16.msra.mxu0 0
    %533 = vmatprep.subr.bf16.mxu0 0
    %534 = vmatpush2.bf16.msra.mxu0 0
    %535 = vmatprep.subr.bf16.mxu0 0
    %536 = vmatpush2.bf16.msra.mxu0 0
    %537 = vmatprep.subr.bf16.mxu0 0
    %538 = vmatpush2.bf16.msra.mxu0 0
    %539 = vmatprep.subr.bf16.mxu0 0
    %540 = vmatpush2.bf16.msra.mxu0 0
    %541 = vmatprep.subr.bf16.mxu0 0
    %542 = vmatpush2.bf16.msra.mxu0 0
    %543 = vmatprep.subr.bf16.mxu0 0
    %544 = vmatpush2.bf16.msra.mxu0 0
    %545 = vmatprep.subr.bf16.mxu0 0
    %546 = vmatpush2.bf16.msra.mxu0 0
    %547 = vmatprep.mubr.bf16.mxu0 0
    %548 = vmatmul.mubr.bf16.gmra.mxu0 %v443
    %v549 = vpop.f32.mrf.mxu0
    %v550 = vadd.f32 0.0, %v549
    %v551 = vpop.f32.mrf.mxu0
    %v552 = vpop.f32.mrf.mxu0
    %v553 = vadd.f32 0.0, %v552
    %v554 = vpop.f32.mrf.mxu0
    %555 = vmatprep.mubr.bf16.mxu0 0
    %556 = vmatmul.mubr.bf16.gmra.mxu0 %v444
    %v557 = vpop.f32.mrf.mxu0
    %v558 = vadd.f32 0.0, %v557
    %v559 = vpop.f32.mrf.mxu0
    %v560 = vpop.f32.mrf.mxu0
    %v561 = vadd.f32 0.0, %v560
    %v562 = vpop.f32.mrf.mxu0
    %563 = vmatprep.mubr.bf16.mxu0 0
    %564 = vmatmul.mubr.bf16.gmra.mxu0 %v445
    %v565 = vpop.f32.mrf.mxu0
    %v566 = vadd.f32 0.0, %v565
    %v567 = vpop.f32.mrf.mxu0
    %v568 = vpop.f32.mrf.mxu0
    %v569 = vadd.f32 0.0, %v568
    %v570 = vpop.f32.mrf.mxu0
    %571 = vmatprep.mubr.bf16.mxu0 0
    %572 = vmatmul.mubr.bf16.gmra.mxu0 %v446
    %v573 = vpop.f32.mrf.mxu0
    %v574 = vadd.f32 0.0, %v573
    %v575 = vpop.f32.mrf.mxu0
    %v576 = vpop.f32.mrf.mxu0
    %v577 = vadd.f32 0.0, %v576
    %v578 = vpop.f32.mrf.mxu0
    %579 = vmatprep.mubr.bf16.mxu0 0
    %580 = vmatmul.mubr.bf16.gmra.mxu0 %v447
    %v581 = vpop.f32.mrf.mxu0
    %v582 = vadd.f32 0.0, %v581
    %v583 = vpop.f32.mrf.mxu0
    %v584 = vpop.f32.mrf.mxu0
    %v585 = vadd.f32 0.0, %v584
    %v586 = vpop.f32.mrf.mxu0
    %587 = vmatprep.mubr.bf16.mxu0 0
    %588 = vmatmul.mubr.bf16.gmra.mxu0 %v448
    %v589 = vpop.f32.mrf.mxu0
    %v590 = vadd.f32 0.0, %v589
    %v591 = vpop.f32.mrf.mxu0
    %v592 = vpop.f32.mrf.mxu0
    %v593 = vadd.f32 0.0, %v592
    %v594 = vpop.f32.mrf.mxu0
    %595 = vmatprep.mubr.bf16.mxu0 0
    %596 = vmatmul.mubr.bf16.gmra.mxu0 %v449
    %v597 = vpop.f32.mrf.mxu0
    %v598 = vadd.f32 0.0, %v597
    %v599 = vpop.f32.mrf.mxu0
    %v600 = vpop.f32.mrf.mxu0
    %v601 = vadd.f32 0.0, %v600
    %v602 = vpop.f32.mrf.mxu0
    %603 = vmatprep.mubr.bf16.mxu0 0
    %604 = vmatmul.mubr.bf16.gmra.mxu0 %v450
    %v605 = vpop.f32.mrf.mxu0
    %v606 = vadd.f32 0.0, %v605
    %v607 = vpop.f32.mrf.mxu0
    %v608 = vpop.f32.mrf.mxu0
    %v609 = vadd.f32 0.0, %v608
    %v610 = vpop.f32.mrf.mxu0
    %611 = vdwg.mxu0
    %vm612 = vcmask 523264
    %v613 = vsel %vm612, %v550, 0.0
    %v614 = vsel %vm612, %v553, 0.0
    %v615 = vadd.f32 %v613, %v614
    %v616 = vsel %vm612, %v558, 0.0
    %v617 = vadd.f32 %v615, %v616
    %v618 = vsel %vm612, %v561, 0.0
    %v619 = vadd.f32 %v617, %v618
    %v620 = vsel %vm612, %v566, 0.0
    %v621 = vadd.f32 %v619, %v620
    %v622 = vsel %vm612, %v569, 0.0
    %v623 = vadd.f32 %v621, %v622
    %v624 = vsel %vm612, %v574, 0.0
    %v625 = vadd.f32 %v623, %v624
    %v626 = vsel %vm612, %v577, 0.0
    %v627 = vadd.f32 %v625, %v626
    %v628 = vsel %vm612, %v582, 0.0
    %v629 = vadd.f32 %v627, %v628
    %v630 = vsel %vm612, %v585, 0.0
    %v631 = vadd.f32 %v629, %v630
    %v632 = vsel %vm612, %v590, 0.0
    %v633 = vadd.f32 %v631, %v632
    %v634 = vsel %vm612, %v593, 0.0
    %v635 = vadd.f32 %v633, %v634
    %v636 = vsel %vm612, %v598, 0.0
    %v637 = vadd.f32 %v635, %v636
    %v638 = vsel %vm612, %v601, 0.0
    %v639 = vadd.f32 %v637, %v638
    %v640 = vsel %vm612, %v606, 0.0
    %v641 = vadd.f32 %v639, %v640
    %v642 = vsel %vm612, %v609, 0.0
    %v643 = vadd.f32 %v641, %v642
    %v644 = vrot.slane %v643, 4
    %v645 = vadd.f32 %v643, %v644
    %v646 = vrot.slane %v645, 2
    %v647 = vadd.f32 %v645, %v646
    %v648 = vrot.slane %v647, 1
    %v649 = vadd.f32 %v647, %v648
    %v650 = vmul.f32 %v649, 0.0078125
    %v651 = vmul.f32 %v550, %v550
    %v652 = vmul.f32 %v553, %v553
    %v653 = vmul.f32 %v558, %v558
    %v654 = vmul.f32 %v561, %v561
    %v655 = vmul.f32 %v566, %v566
    %v656 = vmul.f32 %v569, %v569
    %v657 = vmul.f32 %v574, %v574
    %v658 = vmul.f32 %v577, %v577
    %v659 = vmul.f32 %v582, %v582
    %v660 = vmul.f32 %v585, %v585
    %v661 = vmul.f32 %v590, %v590
    %v662 = vmul.f32 %v593, %v593
    %v663 = vmul.f32 %v598, %v598
    %v664 = vmul.f32 %v601, %v601
    %v665 = vmul.f32 %v606, %v606
    %v666 = vmul.f32 %v609, %v609
    %v667 = vsel %vm612, %v651, 0.0
    %v668 = vsel %vm612, %v652, 0.0
    %v669 = vadd.f32 %v667, %v668
    %v670 = vsel %vm612, %v653, 0.0
    %v671 = vadd.f32 %v669, %v670
    %v672 = vsel %vm612, %v654, 0.0
    %v673 = vadd.f32 %v671, %v672
    %v674 = vsel %vm612, %v655, 0.0
    %v675 = vadd.f32 %v673, %v674
    %v676 = vsel %vm612, %v656, 0.0
    %v677 = vadd.f32 %v675, %v676
    %v678 = vsel %vm612, %v657, 0.0
    %v679 = vadd.f32 %v677, %v678
    %v680 = vsel %vm612, %v658, 0.0
    %v681 = vadd.f32 %v679, %v680
    %v682 = vsel %vm612, %v659, 0.0
    %v683 = vadd.f32 %v681, %v682
    %v684 = vsel %vm612, %v660, 0.0
    %v685 = vadd.f32 %v683, %v684
    %v686 = vsel %vm612, %v661, 0.0
    %v687 = vadd.f32 %v685, %v686
    %v688 = vsel %vm612, %v662, 0.0
    %v689 = vadd.f32 %v687, %v688
    %v690 = vsel %vm612, %v663, 0.0
    %v691 = vadd.f32 %v689, %v690
    %v692 = vsel %vm612, %v664, 0.0
    %v693 = vadd.f32 %v691, %v692
    %v694 = vsel %vm612, %v665, 0.0
    %v695 = vadd.f32 %v693, %v694
    %v696 = vsel %vm612, %v666, 0.0
    %v697 = vadd.f32 %v695, %v696
    %v698 = vrot.slane %v697, 4
    %v699 = vadd.f32 %v697, %v698
    %v700 = vrot.slane %v699, 2
    %v701 = vadd.f32 %v699, %v700
    %v702 = vrot.slane %v701, 1
    %v703 = vadd.f32 %v701, %v702
    %v704 = vmul.f32 %v703, 0.0078125
    %v705 = vmul.f32 %v650, %v650
    %v706 = vsub.f32 %v704, %v705
    %v707 = vmax.f32 %v706, 0.0
    %v708 = vsub.f32 %v550, %v650
    %v709 = vsub.f32 %v553, %v650
    %v710 = vsub.f32 %v558, %v650
    %v711 = vsub.f32 %v561, %v650
    %v712 = vsub.f32 %v566, %v650
    %v713 = vsub.f32 %v569, %v650
    %v714 = vsub.f32 %v574, %v650
    %v715 = vsub.f32 %v577, %v650
    %v716 = vsub.f32 %v582, %v650
    %v717 = vsub.f32 %v585, %v650
    %v718 = vsub.f32 %v590, %v650
    %v719 = vsub.f32 %v593, %v650
    %v720 = vsub.f32 %v598, %v650
    %v721 = vsub.f32 %v601, %v650
    %v722 = vsub.f32 %v606, %v650
    %v723 = vsub.f32 %v609, %v650
    %v724 = vadd.f32 %v707, 0.0001
    %v725 = vrsqrt.pop %v724
    %v726 = vmul.f32 %v708, %v725
    %v727 = vmul.f32 %v709, %v725
    %v728 = vmul.f32 %v710, %v725
    %v729 = vmul.f32 %v711, %v725
    %v730 = vmul.f32 %v712, %v725
    %v731 = vmul.f32 %v713, %v725
    %v732 = vmul.f32 %v714, %v725
    %v733 = vmul.f32 %v715, %v725
    %v734 = vmul.f32 %v716, %v725
    %v735 = vmul.f32 %v717, %v725
    %v736 = vmul.f32 %v718, %v725
    %v737 = vmul.f32 %v719, %v725
    %v738 = vmul.f32 %v720, %v725
    %v739 = vmul.f32 %v721, %v725
    %v740 = vmul.f32 %v722, %v725
    %v741 = vmul.f32 %v723, %v725
    %vm742 = vcmp.ge.f32.partialorder %v726, 0.0
    %vm743 = vcmp.ge.f32.partialorder %v727, 0.0
    %vm744 = vcmp.ge.f32.partialorder %v728, 0.0
    %vm745 = vcmp.ge.f32.partialorder %v729, 0.0
    %vm746 = vcmp.ge.f32.partialorder %v730, 0.0
    %vm747 = vcmp.ge.f32.partialorder %v731, 0.0
    %vm748 = vcmp.ge.f32.partialorder %v732, 0.0
    %vm749 = vcmp.ge.f32.partialorder %v733, 0.0
    %vm750 = vcmp.ge.f32.partialorder %v734, 0.0
    %vm751 = vcmp.ge.f32.partialorder %v735, 0.0
    %vm752 = vcmp.ge.f32.partialorder %v736, 0.0
    %vm753 = vcmp.ge.f32.partialorder %v737, 0.0
    %vm754 = vcmp.ge.f32.partialorder %v738, 0.0
    %vm755 = vcmp.ge.f32.partialorder %v739, 0.0
    %vm756 = vcmp.ge.f32.partialorder %v740, 0.0
    %vm757 = vcmp.ge.f32.partialorder %v741, 0.0
    %v758 = vmul.f32 %v726, 0.01
    %v759 = vmul.f32 %v727, 0.01
    %v760 = vmul.f32 %v728, 0.01
    %v761 = vmul.f32 %v729, 0.01
    %v762 = vmul.f32 %v730, 0.01
    %v763 = vmul.f32 %v731, 0.01
    %v764 = vmul.f32 %v732, 0.01
    %v765 = vmul.f32 %v733, 0.01
    %v766 = vmul.f32 %v734, 0.01
    %v767 = vmul.f32 %v735, 0.01
    %v768 = vmul.f32 %v736, 0.01
    %v769 = vmul.f32 %v737, 0.01
    %v770 = vmul.f32 %v738, 0.01
    %v771 = vmul.f32 %v739, 0.01
    %v772 = vmul.f32 %v740, 0.01
    %v773 = vmul.f32 %v741, 0.01
    %v774 = vsel %vm742, %v726, %v758
    %v775 = vsel %vm743, %v727, %v759
    %v776 = vsel %vm744, %v728, %v760
    %v777 = vsel %vm745, %v729, %v761
    %v778 = vsel %vm746, %v730, %v762
    %v779 = vsel %vm747, %v731, %v763
    %v780 = vsel %vm748, %v732, %v764
    %v781 = vsel %vm749, %v733, %v765
    %v782 = vsel %vm750, %v734, %v766
    %v783 = vsel %vm751, %v735, %v767
    %v784 = vsel %vm752, %v736, %v768
    %v785 = vsel %vm753, %v737, %v769
    %v786 = vsel %vm754, %v738, %v770
    %v787 = vsel %vm755, %v739, %v771
    %v788 = vsel %vm756, %v740, %v772
    %v789 = vsel %vm757, %v741, %v773
    %v790 = vpack.c.bf16 %v775, %v774
    %v791 = vpack.c.bf16 %v777, %v776
    %v792 = vpack.c.bf16 %v779, %v778
    %v793 = vpack.c.bf16 %v781, %v780
    %v794 = vpack.c.bf16 %v783, %v782
    %v795 = vpack.c.bf16 %v785, %v784
    %v796 = vpack.c.bf16 %v787, %v786
    %v797 = vpack.c.bf16 %v789, %v788
    %v798 = vld [vmem:[%s3] sm:$0xf]
    %v799 = vld [vmem:[%s3 + $0x4] sm:$0xf]
    %v800 = vld [vmem:[%s3 + $0x8] sm:$0xf]
    %v801 = vld [vmem:[%s3 + $0xc] sm:$0xf]
    %v802 = vld [vmem:[%s3 + $0x10] sm:$0xf]
    %v803 = vld [vmem:[%s3 + $0x14] sm:$0xf]
    %v804 = vld [vmem:[%s3 + $0x18] sm:$0xf]
    %v805 = vld [vmem:[%s3 + $0x1c] sm:$0xf]
    %v814 = vunpack.c.l.b16 %v798
    %v815 = vunpack.c.l.b16 %v799
    %v816 = vunpack.c.l.b16 %v800
    %v817 = vunpack.c.l.b16 %v801
    %v818 = vunpack.c.l.b16 %v802
    %v819 = vunpack.c.l.b16 %v803
    %v820 = vunpack.c.l.b16 %v804
    %v821 = vunpack.c.l.b16 %v805
    %v822 = vpack.c.b16 %v815, %v814
    %v823 = vpack.c.b16 %v817, %v816
    %v824 = vpack.c.b16 %v819, %v818
    %v825 = vpack.c.b16 %v821, %v820
    %v831 = vsel %vm612, %v790, 0
    %v834 = vsel %vm612, %v791, 0
    %v837 = vsel %vm612, %v792, 0
    %v840 = vsel %vm612, %v793, 0
    %v843 = vsel %vm612, %v794, 0
    %v846 = vsel %vm612, %v795, 0
    %v849 = vsel %vm612, %v796, 0
    %v852 = vsel %vm612, %v797, 0
    %854 = vmatprep.subr.bf16.mxu0 0
    %855 = vmatpush1.bf16.msra.mxu0 0
    %856 = vmatprep.subr.bf16.mxu0 0
    %857 = vmatpush1.bf16.msra.mxu0 0
    %858 = vmatprep.subr.bf16.mxu0 0
    %859 = vmatpush1.bf16.msra.mxu0 0
    %860 = vmatprep.subr.bf16.mxu0 0
    %861 = vmatpush1.bf16.msra.mxu0 0
    %862 = vmatprep.subr.bf16.mxu0 0
    %863 = vmatpush1.bf16.msra.mxu0 %v825
    %864 = vmatprep.subr.bf16.mxu0 0
    %865 = vmatpush1.bf16.msra.mxu0 %v824
    %866 = vmatprep.subr.bf16.mxu0 0
    %867 = vmatpush1.bf16.msra.mxu0 %v823
    %868 = vmatprep.subr.bf16.mxu0 0
    %869 = vmatpush1.bf16.msra.mxu0 %v822
    %870 = vmatprep.subr.bf16.mxu0 0
    %871 = vmatpush2.bf16.msra.mxu0 0
    %872 = vmatprep.subr.bf16.mxu0 0
    %873 = vmatpush2.bf16.msra.mxu0 0
    %874 = vmatprep.subr.bf16.mxu0 0
    %875 = vmatpush2.bf16.msra.mxu0 0
    %876 = vmatprep.subr.bf16.mxu0 0
    %877 = vmatpush2.bf16.msra.mxu0 0
    %878 = vmatprep.subr.bf16.mxu0 0
    %879 = vmatpush2.bf16.msra.mxu0 0
    %880 = vmatprep.subr.bf16.mxu0 0
    %881 = vmatpush2.bf16.msra.mxu0 0
    %882 = vmatprep.subr.bf16.mxu0 0
    %883 = vmatpush2.bf16.msra.mxu0 0
    %884 = vmatprep.subr.bf16.mxu0 0
    %885 = vmatpush2.bf16.msra.mxu0 0
    %886 = vmatprep.mubr.bf16.mxu0 0
    %887 = vmatmul.mubr.bf16.gmra.mxu0 %v831
    %v888 = vpop.f32.mrf.mxu0
    %v889 = vadd.f32 0.0, %v888
    %v890 = vpop.f32.mrf.mxu0
    %v891 = vpop.f32.mrf.mxu0
    %v892 = vadd.f32 0.0, %v891
    %v893 = vpop.f32.mrf.mxu0
    %894 = vmatprep.mubr.bf16.mxu0 0
    %895 = vmatmul.mubr.bf16.gmra.mxu0 %v834
    %v896 = vpop.f32.mrf.mxu0
    %v897 = vadd.f32 0.0, %v896
    %v898 = vpop.f32.mrf.mxu0
    %v899 = vpop.f32.mrf.mxu0
    %v900 = vadd.f32 0.0, %v899
    %v901 = vpop.f32.mrf.mxu0
    %902 = vmatprep.mubr.bf16.mxu0 0
    %903 = vmatmul.mubr.bf16.gmra.mxu0 %v837
    %v904 = vpop.f32.mrf.mxu0
    %v905 = vadd.f32 0.0, %v904
    %v906 = vpop.f32.mrf.mxu0
    %v907 = vpop.f32.mrf.mxu0
    %v908 = vadd.f32 0.0, %v907
    %v909 = vpop.f32.mrf.mxu0
    %910 = vmatprep.mubr.bf16.mxu0 0
    %911 = vmatmul.mubr.bf16.gmra.mxu0 %v840
    %v912 = vpop.f32.mrf.mxu0
    %v913 = vadd.f32 0.0, %v912
    %v914 = vpop.f32.mrf.mxu0
    %v915 = vpop.f32.mrf.mxu0
    %v916 = vadd.f32 0.0, %v915
    %v917 = vpop.f32.mrf.mxu0
    %918 = vmatprep.mubr.bf16.mxu0 0
    %919 = vmatmul.mubr.bf16.gmra.mxu0 %v843
    %v920 = vpop.f32.mrf.mxu0
    %v921 = vadd.f32 0.0, %v920
    %v922 = vpop.f32.mrf.mxu0
    %v923 = vpop.f32.mrf.mxu0
    %v924 = vadd.f32 0.0, %v923
    %v925 = vpop.f32.mrf.mxu0
    %926 = vmatprep.mubr.bf16.mxu0 0
    %927 = vmatmul.mubr.bf16.gmra.mxu0 %v846
    %v928 = vpop.f32.mrf.mxu0
    %v929 = vadd.f32 0.0, %v928
    %v930 = vpop.f32.mrf.mxu0
    %v931 = vpop.f32.mrf.mxu0
    %v932 = vadd.f32 0.0, %v931
    %v933 = vpop.f32.mrf.mxu0
    %934 = vmatprep.mubr.bf16.mxu0 0
    %935 = vmatmul.mubr.bf16.gmra.mxu0 %v849
    %v936 = vpop.f32.mrf.mxu0
    %v937 = vadd.f32 0.0, %v936
    %v938 = vpop.f32.mrf.mxu0
    %v939 = vpop.f32.mrf.mxu0
    %v940 = vadd.f32 0.0, %v939
    %v941 = vpop.f32.mrf.mxu0
    %942 = vmatprep.mubr.bf16.mxu0 0
    %943 = vmatmul.mubr.bf16.gmra.mxu0 %v852
    %v944 = vpop.f32.mrf.mxu0
    %v945 = vadd.f32 0.0, %v944
    %v946 = vpop.f32.mrf.mxu0
    %v947 = vpop.f32.mrf.mxu0
    %v948 = vadd.f32 0.0, %v947
    %v949 = vpop.f32.mrf.mxu0
    %950 = vdwg.mxu0
    %v951 = vsel %vm612, %v889, 0.0
    %v952 = vsel %vm612, %v892, 0.0
    %v953 = vadd.f32 %v951, %v952
    %v954 = vsel %vm612, %v897, 0.0
    %v955 = vadd.f32 %v953, %v954
    %v956 = vsel %vm612, %v900, 0.0
    %v957 = vadd.f32 %v955, %v956
    %v958 = vsel %vm612, %v905, 0.0
    %v959 = vadd.f32 %v957, %v958
    %v960 = vsel %vm612, %v908, 0.0
    %v961 = vadd.f32 %v959, %v960
    %v962 = vsel %vm612, %v913, 0.0
    %v963 = vadd.f32 %v961, %v962
    %v964 = vsel %vm612, %v916, 0.0
    %v965 = vadd.f32 %v963, %v964
    %v966 = vsel %vm612, %v921, 0.0
    %v967 = vadd.f32 %v965, %v966
    %v968 = vsel %vm612, %v924, 0.0
    %v969 = vadd.f32 %v967, %v968
    %v970 = vsel %vm612, %v929, 0.0
    %v971 = vadd.f32 %v969, %v970
    %v972 = vsel %vm612, %v932, 0.0
    %v973 = vadd.f32 %v971, %v972
    %v974 = vsel %vm612, %v937, 0.0
    %v975 = vadd.f32 %v973, %v974
    %v976 = vsel %vm612, %v940, 0.0
    %v977 = vadd.f32 %v975, %v976
    %v978 = vsel %vm612, %v945, 0.0
    %v979 = vadd.f32 %v977, %v978
    %v980 = vsel %vm612, %v948, 0.0
    %v981 = vadd.f32 %v979, %v980
    %v982 = vrot.slane %v981, 4
    %v983 = vadd.f32 %v981, %v982
    %v984 = vrot.slane %v983, 2
    %v985 = vadd.f32 %v983, %v984
    %v986 = vrot.slane %v985, 1
    %v987 = vadd.f32 %v985, %v986
    %v988 = vmul.f32 %v987, 0.0078125
    %v989 = vmul.f32 %v889, %v889
    %v990 = vmul.f32 %v892, %v892
    %v991 = vmul.f32 %v897, %v897
    %v992 = vmul.f32 %v900, %v900
    %v993 = vmul.f32 %v905, %v905
    %v994 = vmul.f32 %v908, %v908
    %v995 = vmul.f32 %v913, %v913
    %v996 = vmul.f32 %v916, %v916
    %v997 = vmul.f32 %v921, %v921
    %v998 = vmul.f32 %v924, %v924
    %v999 = vmul.f32 %v929, %v929
    %v1000 = vmul.f32 %v932, %v932
    %v1001 = vmul.f32 %v937, %v937
    %v1002 = vmul.f32 %v940, %v940
    %v1003 = vmul.f32 %v945, %v945
    %v1004 = vmul.f32 %v948, %v948
    %v1005 = vsel %vm612, %v989, 0.0
    %v1006 = vsel %vm612, %v990, 0.0
    %v1007 = vadd.f32 %v1005, %v1006
    %v1008 = vsel %vm612, %v991, 0.0
    %v1009 = vadd.f32 %v1007, %v1008
    %v1010 = vsel %vm612, %v992, 0.0
    %v1011 = vadd.f32 %v1009, %v1010
    %v1012 = vsel %vm612, %v993, 0.0
    %v1013 = vadd.f32 %v1011, %v1012
    %v1014 = vsel %vm612, %v994, 0.0
    %v1015 = vadd.f32 %v1013, %v1014
    %v1016 = vsel %vm612, %v995, 0.0
    %v1017 = vadd.f32 %v1015, %v1016
    %v1018 = vsel %vm612, %v996, 0.0
    %v1019 = vadd.f32 %v1017, %v1018
    %v1020 = vsel %vm612, %v997, 0.0
    %v1021 = vadd.f32 %v1019, %v1020
    %v1022 = vsel %vm612, %v998, 0.0
    %v1023 = vadd.f32 %v1021, %v1022
    %v1024 = vsel %vm612, %v999, 0.0
    %v1025 = vadd.f32 %v1023, %v1024
    %v1026 = vsel %vm612, %v1000, 0.0
    %v1027 = vadd.f32 %v1025, %v1026
    %v1028 = vsel %vm612, %v1001, 0.0
    %v1029 = vadd.f32 %v1027, %v1028
    %v1030 = vsel %vm612, %v1002, 0.0
    %v1031 = vadd.f32 %v1029, %v1030
    %v1032 = vsel %vm612, %v1003, 0.0
    %v1033 = vadd.f32 %v1031, %v1032
    %v1034 = vsel %vm612, %v1004, 0.0
    %v1035 = vadd.f32 %v1033, %v1034
    %v1036 = vrot.slane %v1035, 4
    %v1037 = vadd.f32 %v1035, %v1036
    %v1038 = vrot.slane %v1037, 2
    %v1039 = vadd.f32 %v1037, %v1038
    %v1040 = vrot.slane %v1039, 1
    %v1041 = vadd.f32 %v1039, %v1040
    %v1042 = vmul.f32 %v1041, 0.0078125
    %v1043 = vmul.f32 %v988, %v988
    %v1044 = vsub.f32 %v1042, %v1043
    %v1045 = vmax.f32 %v1044, 0.0
    %v1046 = vsub.f32 %v889, %v988
    %v1047 = vsub.f32 %v892, %v988
    %v1048 = vsub.f32 %v897, %v988
    %v1049 = vsub.f32 %v900, %v988
    %v1050 = vsub.f32 %v905, %v988
    %v1051 = vsub.f32 %v908, %v988
    %v1052 = vsub.f32 %v913, %v988
    %v1053 = vsub.f32 %v916, %v988
    %v1054 = vsub.f32 %v921, %v988
    %v1055 = vsub.f32 %v924, %v988
    %v1056 = vsub.f32 %v929, %v988
    %v1057 = vsub.f32 %v932, %v988
    %v1058 = vsub.f32 %v937, %v988
    %v1059 = vsub.f32 %v940, %v988
    %v1060 = vsub.f32 %v945, %v988
    %v1061 = vsub.f32 %v948, %v988
    %v1062 = vadd.f32 %v1045, 0.0001
    %v1063 = vrsqrt.pop %v1062
    %v1064 = vmul.f32 %v1046, %v1063
    %v1065 = vmul.f32 %v1047, %v1063
    %v1066 = vmul.f32 %v1048, %v1063
    %v1067 = vmul.f32 %v1049, %v1063
    %v1068 = vmul.f32 %v1050, %v1063
    %v1069 = vmul.f32 %v1051, %v1063
    %v1070 = vmul.f32 %v1052, %v1063
    %v1071 = vmul.f32 %v1053, %v1063
    %v1072 = vmul.f32 %v1054, %v1063
    %v1073 = vmul.f32 %v1055, %v1063
    %v1074 = vmul.f32 %v1056, %v1063
    %v1075 = vmul.f32 %v1057, %v1063
    %v1076 = vmul.f32 %v1058, %v1063
    %v1077 = vmul.f32 %v1059, %v1063
    %v1078 = vmul.f32 %v1060, %v1063
    %v1079 = vmul.f32 %v1061, %v1063
    %vm1080 = vcmp.ge.f32.partialorder %v1064, 0.0
    %vm1081 = vcmp.ge.f32.partialorder %v1065, 0.0
    %vm1082 = vcmp.ge.f32.partialorder %v1066, 0.0
    %vm1083 = vcmp.ge.f32.partialorder %v1067, 0.0
    %vm1084 = vcmp.ge.f32.partialorder %v1068, 0.0
    %vm1085 = vcmp.ge.f32.partialorder %v1069, 0.0
    %vm1086 = vcmp.ge.f32.partialorder %v1070, 0.0
    %vm1087 = vcmp.ge.f32.partialorder %v1071, 0.0
    %vm1088 = vcmp.ge.f32.partialorder %v1072, 0.0
    %vm1089 = vcmp.ge.f32.partialorder %v1073, 0.0
    %vm1090 = vcmp.ge.f32.partialorder %v1074, 0.0
    %vm1091 = vcmp.ge.f32.partialorder %v1075, 0.0
    %vm1092 = vcmp.ge.f32.partialorder %v1076, 0.0
    %vm1093 = vcmp.ge.f32.partialorder %v1077, 0.0
    %vm1094 = vcmp.ge.f32.partialorder %v1078, 0.0
    %vm1095 = vcmp.ge.f32.partialorder %v1079, 0.0
    %v1096 = vmul.f32 %v1064, 0.01
    %v1097 = vmul.f32 %v1065, 0.01
    %v1098 = vmul.f32 %v1066, 0.01
    %v1099 = vmul.f32 %v1067, 0.01
    %v1100 = vmul.f32 %v1068, 0.01
    %v1101 = vmul.f32 %v1069, 0.01
    %v1102 = vmul.f32 %v1070, 0.01
    %v1103 = vmul.f32 %v1071, 0.01
    %v1104 = vmul.f32 %v1072, 0.01
    %v1105 = vmul.f32 %v1073, 0.01
    %v1106 = vmul.f32 %v1074, 0.01
    %v1107 = vmul.f32 %v1075, 0.01
    %v1108 = vmul.f32 %v1076, 0.01
    %v1109 = vmul.f32 %v1077, 0.01
    %v1110 = vmul.f32 %v1078, 0.01
    %v1111 = vmul.f32 %v1079, 0.01
    %v1112 = vsel %vm1080, %v1064, %v1096
    %v1113 = vsel %vm1081, %v1065, %v1097
    %v1114 = vsel %vm1082, %v1066, %v1098
    %v1115 = vsel %vm1083, %v1067, %v1099
    %v1116 = vsel %vm1084, %v1068, %v1100
    %v1117 = vsel %vm1085, %v1069, %v1101
    %v1118 = vsel %vm1086, %v1070, %v1102
    %v1119 = vsel %vm1087, %v1071, %v1103
    %v1120 = vsel %vm1088, %v1072, %v1104
    %v1121 = vsel %vm1089, %v1073, %v1105
    %v1122 = vsel %vm1090, %v1074, %v1106
    %v1123 = vsel %vm1091, %v1075, %v1107
    %v1124 = vsel %vm1092, %v1076, %v1108
    %v1125 = vsel %vm1093, %v1077, %v1109
    %v1126 = vsel %vm1094, %v1078, %v1110
    %v1127 = vsel %vm1095, %v1079, %v1111
    %v1128 = vpack.c.bf16 %v1113, %v1112
    %v1129 = vpack.c.bf16 %v1115, %v1114
    %v1130 = vpack.c.bf16 %v1117, %v1116
    %v1131 = vpack.c.bf16 %v1119, %v1118
    %v1132 = vpack.c.bf16 %v1121, %v1120
    %v1133 = vpack.c.bf16 %v1123, %v1122
    %v1134 = vpack.c.bf16 %v1125, %v1124
    %v1135 = vpack.c.bf16 %v1127, %v1126
    %v1136 = vld [vmem:[%s4] sm:$0xf]
    %v1137 = vld [vmem:[%s4 + $0x4] sm:$0xf]
    %v1138 = vld [vmem:[%s4 + $0x8] sm:$0xf]
    %v1139 = vld [vmem:[%s4 + $0xc] sm:$0xf]
    %v1140 = vld [vmem:[%s4 + $0x10] sm:$0xf]
    %v1141 = vld [vmem:[%s4 + $0x14] sm:$0xf]
    %v1142 = vld [vmem:[%s4 + $0x18] sm:$0xf]
    %v1143 = vld [vmem:[%s4 + $0x1c] sm:$0xf]
    %v1152 = vunpack.c.l.b16 %v1136
    %v1153 = vunpack.c.l.b16 %v1137
    %v1154 = vunpack.c.l.b16 %v1138
    %v1155 = vunpack.c.l.b16 %v1139
    %v1156 = vunpack.c.l.b16 %v1140
    %v1157 = vunpack.c.l.b16 %v1141
    %v1158 = vunpack.c.l.b16 %v1142
    %v1159 = vunpack.c.l.b16 %v1143
    %v1160 = vpack.c.b16 %v1153, %v1152
    %v1161 = vpack.c.b16 %v1155, %v1154
    %v1162 = vpack.c.b16 %v1157, %v1156
    %v1163 = vpack.c.b16 %v1159, %v1158
    %v1169 = vsel %vm612, %v1128, 0
    %v1172 = vsel %vm612, %v1129, 0
    %v1175 = vsel %vm612, %v1130, 0
    %v1178 = vsel %vm612, %v1131, 0
    %v1181 = vsel %vm612, %v1132, 0
    %v1184 = vsel %vm612, %v1133, 0
    %v1187 = vsel %vm612, %v1134, 0
    %v1190 = vsel %vm612, %v1135, 0
    %1192 = vmatprep.subr.bf16.mxu0 0
    %1193 = vmatpush1.bf16.msra.mxu0 0
    %1194 = vmatprep.subr.bf16.mxu0 0
    %1195 = vmatpush1.bf16.msra.mxu0 0
    %1196 = vmatprep.subr.bf16.mxu0 0
    %1197 = vmatpush1.bf16.msra.mxu0 0
    %1198 = vmatprep.subr.bf16.mxu0 0
    %1199 = vmatpush1.bf16.msra.mxu0 0
    %1200 = vmatprep.subr.bf16.mxu0 0
    %1201 = vmatpush1.bf16.msra.mxu0 %v1163
    %1202 = vmatprep.subr.bf16.mxu0 0
    %1203 = vmatpush1.bf16.msra.mxu0 %v1162
    %1204 = vmatprep.subr.bf16.mxu0 0
    %1205 = vmatpush1.bf16.msra.mxu0 %v1161
    %1206 = vmatprep.subr.bf16.mxu0 0
    %1207 = vmatpush1.bf16.msra.mxu0 %v1160
    %1208 = vmatprep.subr.bf16.mxu0 0
    %1209 = vmatpush2.bf16.msra.mxu0 0
    %1210 = vmatprep.subr.bf16.mxu0 0
    %1211 = vmatpush2.bf16.msra.mxu0 0
    %1212 = vmatprep.subr.bf16.mxu0 0
    %1213 = vmatpush2.bf16.msra.mxu0 0
    %1214 = vmatprep.subr.bf16.mxu0 0
    %1215 = vmatpush2.bf16.msra.mxu0 0
    %1216 = vmatprep.subr.bf16.mxu0 0
    %1217 = vmatpush2.bf16.msra.mxu0 0
    %1218 = vmatprep.subr.bf16.mxu0 0
    %1219 = vmatpush2.bf16.msra.mxu0 0
    %1220 = vmatprep.subr.bf16.mxu0 0
    %1221 = vmatpush2.bf16.msra.mxu0 0
    %1222 = vmatprep.subr.bf16.mxu0 0
    %1223 = vmatpush2.bf16.msra.mxu0 0
    %1224 = vmatprep.mubr.bf16.mxu0 0
    %1225 = vmatmul.mubr.bf16.gmra.mxu0 %v1169
    %v1226 = vpop.f32.mrf.mxu0
    %v1227 = vadd.f32 0.0, %v1226
    %v1228 = vpop.f32.mrf.mxu0
    %v1229 = vpop.f32.mrf.mxu0
    %v1230 = vadd.f32 0.0, %v1229
    %v1231 = vpop.f32.mrf.mxu0
    %1232 = vmatprep.mubr.bf16.mxu0 0
    %1233 = vmatmul.mubr.bf16.gmra.mxu0 %v1172
    %v1234 = vpop.f32.mrf.mxu0
    %v1235 = vadd.f32 0.0, %v1234
    %v1236 = vpop.f32.mrf.mxu0
    %v1237 = vpop.f32.mrf.mxu0
    %v1238 = vadd.f32 0.0, %v1237
    %v1239 = vpop.f32.mrf.mxu0
    %1240 = vmatprep.mubr.bf16.mxu0 0
    %1241 = vmatmul.mubr.bf16.gmra.mxu0 %v1175
    %v1242 = vpop.f32.mrf.mxu0
    %v1243 = vadd.f32 0.0, %v1242
    %v1244 = vpop.f32.mrf.mxu0
    %v1245 = vpop.f32.mrf.mxu0
    %v1246 = vadd.f32 0.0, %v1245
    %v1247 = vpop.f32.mrf.mxu0
    %1248 = vmatprep.mubr.bf16.mxu0 0
    %1249 = vmatmul.mubr.bf16.gmra.mxu0 %v1178
    %v1250 = vpop.f32.mrf.mxu0
    %v1251 = vadd.f32 0.0, %v1250
    %v1252 = vpop.f32.mrf.mxu0
    %v1253 = vpop.f32.mrf.mxu0
    %v1254 = vadd.f32 0.0, %v1253
    %v1255 = vpop.f32.mrf.mxu0
    %1256 = vmatprep.mubr.bf16.mxu0 0
    %1257 = vmatmul.mubr.bf16.gmra.mxu0 %v1181
    %v1258 = vpop.f32.mrf.mxu0
    %v1259 = vadd.f32 0.0, %v1258
    %v1260 = vpop.f32.mrf.mxu0
    %v1261 = vpop.f32.mrf.mxu0
    %v1262 = vadd.f32 0.0, %v1261
    %v1263 = vpop.f32.mrf.mxu0
    %1264 = vmatprep.mubr.bf16.mxu0 0
    %1265 = vmatmul.mubr.bf16.gmra.mxu0 %v1184
    %v1266 = vpop.f32.mrf.mxu0
    %v1267 = vadd.f32 0.0, %v1266
    %v1268 = vpop.f32.mrf.mxu0
    %v1269 = vpop.f32.mrf.mxu0
    %v1270 = vadd.f32 0.0, %v1269
    %v1271 = vpop.f32.mrf.mxu0
    %1272 = vmatprep.mubr.bf16.mxu0 0
    %1273 = vmatmul.mubr.bf16.gmra.mxu0 %v1187
    %v1274 = vpop.f32.mrf.mxu0
    %v1275 = vadd.f32 0.0, %v1274
    %v1276 = vpop.f32.mrf.mxu0
    %v1277 = vpop.f32.mrf.mxu0
    %v1278 = vadd.f32 0.0, %v1277
    %v1279 = vpop.f32.mrf.mxu0
    %1280 = vmatprep.mubr.bf16.mxu0 0
    %1281 = vmatmul.mubr.bf16.gmra.mxu0 %v1190
    %v1282 = vpop.f32.mrf.mxu0
    %v1283 = vadd.f32 0.0, %v1282
    %v1284 = vpop.f32.mrf.mxu0
    %v1285 = vpop.f32.mrf.mxu0
    %v1286 = vadd.f32 0.0, %v1285
    %v1287 = vpop.f32.mrf.mxu0
    %1288 = vdwg.mxu0
    %v1289 = vadd.f32 %v1227, %v1230
    %v1290 = vadd.f32 %v1289, %v1235
    %v1291 = vadd.f32 %v1290, %v1238
    %v1292 = vadd.f32 %v1291, %v1243
    %v1293 = vadd.f32 %v1292, %v1246
    %v1294 = vadd.f32 %v1293, %v1251
    %v1295 = vadd.f32 %v1294, %v1254
    %v1296 = vadd.f32 %v1295, %v1259
    %v1297 = vadd.f32 %v1296, %v1262
    %v1298 = vadd.f32 %v1297, %v1267
    %v1299 = vadd.f32 %v1298, %v1270
    %v1300 = vadd.f32 %v1299, %v1275
    %v1301 = vadd.f32 %v1300, %v1278
    %v1302 = vadd.f32 %v1301, %v1283
    %v1303 = vadd.f32 %v1302, %v1286
    %v1304 = vrot.slane %v1303, 4
    %v1305 = vadd.f32 %v1303, %v1304
    %v1306 = vrot.slane %v1305, 2
    %v1307 = vadd.f32 %v1305, %v1306
    %v1308 = vrot.slane %v1307, 1
    %v1309 = vadd.f32 %v1307, %v1308
    %v1310 = vmul.f32 %v1309, 0.0078125
    %v1311 = vmul.f32 %v1227, %v1227
    %v1312 = vmul.f32 %v1230, %v1230
    %v1313 = vmul.f32 %v1235, %v1235
    %v1314 = vmul.f32 %v1238, %v1238
    %v1315 = vmul.f32 %v1243, %v1243
    %v1316 = vmul.f32 %v1246, %v1246
    %v1317 = vmul.f32 %v1251, %v1251
    %v1318 = vmul.f32 %v1254, %v1254
    %v1319 = vmul.f32 %v1259, %v1259
    %v1320 = vmul.f32 %v1262, %v1262
    %v1321 = vmul.f32 %v1267, %v1267
    %v1322 = vmul.f32 %v1270, %v1270
    %v1323 = vmul.f32 %v1275, %v1275
    %v1324 = vmul.f32 %v1278, %v1278
    %v1325 = vmul.f32 %v1283, %v1283
    %v1326 = vmul.f32 %v1286, %v1286
    %v1327 = vadd.f32 %v1311, %v1312
    %v1328 = vadd.f32 %v1327, %v1313
    %v1329 = vadd.f32 %v1328, %v1314
    %v1330 = vadd.f32 %v1329, %v1315
    %v1331 = vadd.f32 %v1330, %v1316
    %v1332 = vadd.f32 %v1331, %v1317
    %v1333 = vadd.f32 %v1332, %v1318
    %v1334 = vadd.f32 %v1333, %v1319
    %v1335 = vadd.f32 %v1334, %v1320
    %v1336 = vadd.f32 %v1335, %v1321
    %v1337 = vadd.f32 %v1336, %v1322
    %v1338 = vadd.f32 %v1337, %v1323
    %v1339 = vadd.f32 %v1338, %v1324
    %v1340 = vadd.f32 %v1339, %v1325
    %v1341 = vadd.f32 %v1340, %v1326
    %v1342 = vrot.slane %v1341, 4
    %v1343 = vadd.f32 %v1341, %v1342
    %v1344 = vrot.slane %v1343, 2
    %v1345 = vadd.f32 %v1343, %v1344
    %v1346 = vrot.slane %v1345, 1
    %v1347 = vadd.f32 %v1345, %v1346
    %v1348 = vmul.f32 %v1347, 0.0078125
    %v1349 = vmul.f32 %v1310, %v1310
    %v1350 = vsub.f32 %v1348, %v1349
    %v1351 = vmax.f32 %v1350, 0.0
    %v1352 = vsub.f32 %v1227, %v1310
    %v1353 = vsub.f32 %v1230, %v1310
    %v1354 = vsub.f32 %v1235, %v1310
    %v1355 = vsub.f32 %v1238, %v1310
    %v1356 = vsub.f32 %v1243, %v1310
    %v1357 = vsub.f32 %v1246, %v1310
    %v1358 = vsub.f32 %v1251, %v1310
    %v1359 = vsub.f32 %v1254, %v1310
    %v1360 = vsub.f32 %v1259, %v1310
    %v1361 = vsub.f32 %v1262, %v1310
    %v1362 = vsub.f32 %v1267, %v1310
    %v1363 = vsub.f32 %v1270, %v1310
    %v1364 = vsub.f32 %v1275, %v1310
    %v1365 = vsub.f32 %v1278, %v1310
    %v1366 = vsub.f32 %v1283, %v1310
    %v1367 = vsub.f32 %v1286, %v1310
    %v1368 = vadd.f32 %v1351, 0.0001
    %v1369 = vrsqrt.pop %v1368
    %v1370 = vmul.f32 %v1352, %v1369
    %v1371 = vmul.f32 %v1353, %v1369
    %v1372 = vmul.f32 %v1354, %v1369
    %v1373 = vmul.f32 %v1355, %v1369
    %v1374 = vmul.f32 %v1356, %v1369
    %v1375 = vmul.f32 %v1357, %v1369
    %v1376 = vmul.f32 %v1358, %v1369
    %v1377 = vmul.f32 %v1359, %v1369
    %v1378 = vmul.f32 %v1360, %v1369
    %v1379 = vmul.f32 %v1361, %v1369
    %v1380 = vmul.f32 %v1362, %v1369
    %v1381 = vmul.f32 %v1363, %v1369
    %v1382 = vmul.f32 %v1364, %v1369
    %v1383 = vmul.f32 %v1365, %v1369
    %v1384 = vmul.f32 %v1366, %v1369
    %v1385 = vmul.f32 %v1367, %v1369
    %vm1386 = vcmp.ge.f32.partialorder %v1370, 0.0
    %vm1387 = vcmp.ge.f32.partialorder %v1371, 0.0
    %vm1388 = vcmp.ge.f32.partialorder %v1372, 0.0
    %vm1389 = vcmp.ge.f32.partialorder %v1373, 0.0
    %vm1390 = vcmp.ge.f32.partialorder %v1374, 0.0
    %vm1391 = vcmp.ge.f32.partialorder %v1375, 0.0
    %vm1392 = vcmp.ge.f32.partialorder %v1376, 0.0
    %vm1393 = vcmp.ge.f32.partialorder %v1377, 0.0
    %vm1394 = vcmp.ge.f32.partialorder %v1378, 0.0
    %vm1395 = vcmp.ge.f32.partialorder %v1379, 0.0
    %vm1396 = vcmp.ge.f32.partialorder %v1380, 0.0
    %vm1397 = vcmp.ge.f32.partialorder %v1381, 0.0
    %vm1398 = vcmp.ge.f32.partialorder %v1382, 0.0
    %vm1399 = vcmp.ge.f32.partialorder %v1383, 0.0
    %vm1400 = vcmp.ge.f32.partialorder %v1384, 0.0
    %vm1401 = vcmp.ge.f32.partialorder %v1385, 0.0
    %v1402 = vmul.f32 %v1370, 0.01
    %v1403 = vmul.f32 %v1371, 0.01
    %v1404 = vmul.f32 %v1372, 0.01
    %v1405 = vmul.f32 %v1373, 0.01
    %v1406 = vmul.f32 %v1374, 0.01
    %v1407 = vmul.f32 %v1375, 0.01
    %v1408 = vmul.f32 %v1376, 0.01
    %v1409 = vmul.f32 %v1377, 0.01
    %v1410 = vmul.f32 %v1378, 0.01
    %v1411 = vmul.f32 %v1379, 0.01
    %v1412 = vmul.f32 %v1380, 0.01
    %v1413 = vmul.f32 %v1381, 0.01
    %v1414 = vmul.f32 %v1382, 0.01
    %v1415 = vmul.f32 %v1383, 0.01
    %v1416 = vmul.f32 %v1384, 0.01
    %v1417 = vmul.f32 %v1385, 0.01
    %v1418 = vsel %vm1386, %v1370, %v1402
    %v1419 = vsel %vm1387, %v1371, %v1403
    %v1420 = vsel %vm1388, %v1372, %v1404
    %v1421 = vsel %vm1389, %v1373, %v1405
    %v1422 = vsel %vm1390, %v1374, %v1406
    %v1423 = vsel %vm1391, %v1375, %v1407
    %v1424 = vsel %vm1392, %v1376, %v1408
    %v1425 = vsel %vm1393, %v1377, %v1409
    %v1426 = vsel %vm1394, %v1378, %v1410
    %v1427 = vsel %vm1395, %v1379, %v1411
    %v1428 = vsel %vm1396, %v1380, %v1412
    %v1429 = vsel %vm1397, %v1381, %v1413
    %v1430 = vsel %vm1398, %v1382, %v1414
    %v1431 = vsel %vm1399, %v1383, %v1415
    %v1432 = vsel %vm1400, %v1384, %v1416
    %v1433 = vsel %vm1401, %v1385, %v1417
    %v1434 = vpack.c.bf16 %v1419, %v1418
    %v1435 = vpack.c.bf16 %v1421, %v1420
    %v1436 = vpack.c.bf16 %v1423, %v1422
    %v1437 = vpack.c.bf16 %v1425, %v1424
    %v1438 = vpack.c.bf16 %v1427, %v1426
    %v1439 = vpack.c.bf16 %v1429, %v1428
    %v1440 = vpack.c.bf16 %v1431, %v1430
    %v1441 = vpack.c.bf16 %v1433, %v1432
    %v1442 = vld [vmem:[%s5] sm:$0xff]
    %v1443 = vld [vmem:[%s5 + $0x8] sm:$0xff]
    %v1444 = vld [vmem:[%s5 + $0x10] sm:$0xff]
    %v1445 = vld [vmem:[%s5 + $0x18] sm:$0xff]
    %v1446 = vld [vmem:[%s5 + $0x20] sm:$0xff]
    %v1447 = vld [vmem:[%s5 + $0x28] sm:$0xff]
    %v1448 = vld [vmem:[%s5 + $0x30] sm:$0xff]
    %v1449 = vld [vmem:[%s5 + $0x38] sm:$0xff]
    %v1450 = vld [vmem:[%s5 + $0x40] sm:$0xff]
    %v1451 = vld [vmem:[%s5 + $0x48] sm:$0xff]
    %v1452 = vld [vmem:[%s5 + $0x50] sm:$0xff]
    %v1453 = vld [vmem:[%s5 + $0x58] sm:$0xff]
    %v1454 = vld [vmem:[%s5 + $0x60] sm:$0xff]
    %v1455 = vld [vmem:[%s5 + $0x68] sm:$0xff]
    %v1456 = vld [vmem:[%s5 + $0x70] sm:$0xff]
    %v1457 = vld [vmem:[%s5 + $0x78] sm:$0xff]
    %v1474 = vunpack.c.l.b16 %v1442
    %v1475 = vunpack.c.h.b16 %v1442
    %v1476 = vunpack.c.l.b16 %v1443
    %v1477 = vunpack.c.h.b16 %v1443
    %v1478 = vunpack.c.l.b16 %v1444
    %v1479 = vunpack.c.h.b16 %v1444
    %v1480 = vunpack.c.l.b16 %v1445
    %v1481 = vunpack.c.h.b16 %v1445
    %v1482 = vunpack.c.l.b16 %v1446
    %v1483 = vunpack.c.h.b16 %v1446
    %v1484 = vunpack.c.l.b16 %v1447
    %v1485 = vunpack.c.h.b16 %v1447
    %v1486 = vunpack.c.l.b16 %v1448
    %v1487 = vunpack.c.h.b16 %v1448
    %v1488 = vunpack.c.l.b16 %v1449
    %v1489 = vunpack.c.h.b16 %v1449
    %v1490 = vunpack.c.l.b16 %v1450
    %v1491 = vunpack.c.h.b16 %v1450
    %v1492 = vunpack.c.l.b16 %v1451
    %v1493 = vunpack.c.h.b16 %v1451
    %v1494 = vunpack.c.l.b16 %v1452
    %v1495 = vunpack.c.h.b16 %v1452
    %v1496 = vunpack.c.l.b16 %v1453
    %v1497 = vunpack.c.h.b16 %v1453
    %v1498 = vunpack.c.l.b16 %v1454
    %v1499 = vunpack.c.h.b16 %v1454
    %v1500 = vunpack.c.l.b16 %v1455
    %v1501 = vunpack.c.h.b16 %v1455
    %v1502 = vunpack.c.l.b16 %v1456
    %v1503 = vunpack.c.h.b16 %v1456
    %v1504 = vunpack.c.l.b16 %v1457
    %v1505 = vunpack.c.h.b16 %v1457
    %v1506 = vpack.c.b16 %v1476, %v1474
    %v1507 = vpack.c.b16 %v1477, %v1475
    %v1508 = vpack.c.b16 %v1480, %v1478
    %v1509 = vpack.c.b16 %v1481, %v1479
    %v1510 = vpack.c.b16 %v1484, %v1482
    %v1511 = vpack.c.b16 %v1485, %v1483
    %v1512 = vpack.c.b16 %v1488, %v1486
    %v1513 = vpack.c.b16 %v1489, %v1487
    %v1514 = vpack.c.b16 %v1492, %v1490
    %v1515 = vpack.c.b16 %v1493, %v1491
    %v1516 = vpack.c.b16 %v1496, %v1494
    %v1517 = vpack.c.b16 %v1497, %v1495
    %v1518 = vpack.c.b16 %v1500, %v1498
    %v1519 = vpack.c.b16 %v1501, %v1499
    %v1520 = vpack.c.b16 %v1504, %v1502
    %v1521 = vpack.c.b16 %v1505, %v1503
    %1538 = vmatprep.subr.bf16.mxu0 %v1521
    %1539 = vmatpush1.bf16.msra.mxu0 %v1520
    %1540 = vmatprep.subr.bf16.mxu0 %v1519
    %1541 = vmatpush1.bf16.msra.mxu0 %v1518
    %1542 = vmatprep.subr.bf16.mxu0 %v1517
    %1543 = vmatpush1.bf16.msra.mxu0 %v1516
    %1544 = vmatprep.subr.bf16.mxu0 %v1515
    %1545 = vmatpush1.bf16.msra.mxu0 %v1514
    %1546 = vmatprep.subr.bf16.mxu0 %v1513
    %1547 = vmatpush1.bf16.msra.mxu0 %v1512
    %1548 = vmatprep.subr.bf16.mxu0 %v1511
    %1549 = vmatpush1.bf16.msra.mxu0 %v1510
    %1550 = vmatprep.subr.bf16.mxu0 %v1509
    %1551 = vmatpush1.bf16.msra.mxu0 %v1508
    %1552 = vmatprep.subr.bf16.mxu0 %v1507
    %1553 = vmatpush1.bf16.msra.mxu0 %v1506
    %1554 = vmatprep.subr.bf16.mxu0 0
    %1555 = vmatpush2.bf16.msra.mxu0 0
    %1556 = vmatprep.subr.bf16.mxu0 0
    %1557 = vmatpush2.bf16.msra.mxu0 0
    %1558 = vmatprep.subr.bf16.mxu0 0
    %1559 = vmatpush2.bf16.msra.mxu0 0
    %1560 = vmatprep.subr.bf16.mxu0 0
    %1561 = vmatpush2.bf16.msra.mxu0 0
    %1562 = vmatprep.subr.bf16.mxu0 0
    %1563 = vmatpush2.bf16.msra.mxu0 0
    %1564 = vmatprep.subr.bf16.mxu0 0
    %1565 = vmatpush2.bf16.msra.mxu0 0
    %1566 = vmatprep.subr.bf16.mxu0 0
    %1567 = vmatpush2.bf16.msra.mxu0 0
    %1568 = vmatprep.subr.bf16.mxu0 0
    %1569 = vmatpush2.bf16.msra.mxu0 0
    %1570 = vmatprep.mubr.bf16.mxu0 0
    %1571 = vmatmul.mubr.bf16.gmra.mxu0 %v1434
    %v1572 = vpop.f32.mrf.mxu0
    %v1573 = vadd.f32 0.0, %v1572
    %v1574 = vpop.f32.mrf.mxu0
    %v1575 = vadd.f32 0.0, %v1574
    %v1576 = vpop.f32.mrf.mxu0
    %v1577 = vadd.f32 0.0, %v1576
    %v1578 = vpop.f32.mrf.mxu0
    %v1579 = vadd.f32 0.0, %v1578
    %1580 = vmatprep.mubr.bf16.mxu0 0
    %1581 = vmatmul.mubr.bf16.gmra.mxu0 %v1435
    %v1582 = vpop.f32.mrf.mxu0
    %v1583 = vadd.f32 0.0, %v1582
    %v1584 = vpop.f32.mrf.mxu0
    %v1585 = vadd.f32 0.0, %v1584
    %v1586 = vpop.f32.mrf.mxu0
    %v1587 = vadd.f32 0.0, %v1586
    %v1588 = vpop.f32.mrf.mxu0
    %v1589 = vadd.f32 0.0, %v1588
    %1590 = vmatprep.mubr.bf16.mxu0 0
    %1591 = vmatmul.mubr.bf16.gmra.mxu0 %v1436
    %v1592 = vpop.f32.mrf.mxu0
    %v1593 = vadd.f32 0.0, %v1592
    %v1594 = vpop.f32.mrf.mxu0
    %v1595 = vadd.f32 0.0, %v1594
    %v1596 = vpop.f32.mrf.mxu0
    %v1597 = vadd.f32 0.0, %v1596
    %v1598 = vpop.f32.mrf.mxu0
    %v1599 = vadd.f32 0.0, %v1598
    %1600 = vmatprep.mubr.bf16.mxu0 0
    %1601 = vmatmul.mubr.bf16.gmra.mxu0 %v1437
    %v1602 = vpop.f32.mrf.mxu0
    %v1603 = vadd.f32 0.0, %v1602
    %v1604 = vpop.f32.mrf.mxu0
    %v1605 = vadd.f32 0.0, %v1604
    %v1606 = vpop.f32.mrf.mxu0
    %v1607 = vadd.f32 0.0, %v1606
    %v1608 = vpop.f32.mrf.mxu0
    %v1609 = vadd.f32 0.0, %v1608
    %1610 = vmatprep.mubr.bf16.mxu0 0
    %1611 = vmatmul.mubr.bf16.gmra.mxu0 %v1438
    %v1612 = vpop.f32.mrf.mxu0
    %v1613 = vadd.f32 0.0, %v1612
    %v1614 = vpop.f32.mrf.mxu0
    %v1615 = vadd.f32 0.0, %v1614
    %v1616 = vpop.f32.mrf.mxu0
    %v1617 = vadd.f32 0.0, %v1616
    %v1618 = vpop.f32.mrf.mxu0
    %v1619 = vadd.f32 0.0, %v1618
    %1620 = vmatprep.mubr.bf16.mxu0 0
    %1621 = vmatmul.mubr.bf16.gmra.mxu0 %v1439
    %v1622 = vpop.f32.mrf.mxu0
    %v1623 = vadd.f32 0.0, %v1622
    %v1624 = vpop.f32.mrf.mxu0
    %v1625 = vadd.f32 0.0, %v1624
    %v1626 = vpop.f32.mrf.mxu0
    %v1627 = vadd.f32 0.0, %v1626
    %v1628 = vpop.f32.mrf.mxu0
    %v1629 = vadd.f32 0.0, %v1628
    %1630 = vmatprep.mubr.bf16.mxu0 0
    %1631 = vmatmul.mubr.bf16.gmra.mxu0 %v1440
    %v1632 = vpop.f32.mrf.mxu0
    %v1633 = vadd.f32 0.0, %v1632
    %v1634 = vpop.f32.mrf.mxu0
    %v1635 = vadd.f32 0.0, %v1634
    %v1636 = vpop.f32.mrf.mxu0
    %v1637 = vadd.f32 0.0, %v1636
    %v1638 = vpop.f32.mrf.mxu0
    %v1639 = vadd.f32 0.0, %v1638
    %1640 = vmatprep.mubr.bf16.mxu0 0
    %1641 = vmatmul.mubr.bf16.gmra.mxu0 %v1441
    %v1642 = vpop.f32.mrf.mxu0
    %v1643 = vadd.f32 0.0, %v1642
    %v1644 = vpop.f32.mrf.mxu0
    %v1645 = vadd.f32 0.0, %v1644
    %v1646 = vpop.f32.mrf.mxu0
    %v1647 = vadd.f32 0.0, %v1646
    %v1648 = vpop.f32.mrf.mxu0
    %v1649 = vadd.f32 0.0, %v1648
    %1650 = vdwg.mxu0
    %v1651 = vxor.u32 %v1573, 2147483648
    %v1652 = vxor.u32 %v1575, 2147483648
    %v1653 = vxor.u32 %v1577, 2147483648
    %v1654 = vxor.u32 %v1579, 2147483648
    %v1655 = vxor.u32 %v1583, 2147483648
    %v1656 = vxor.u32 %v1585, 2147483648
    %v1657 = vxor.u32 %v1587, 2147483648
    %v1658 = vxor.u32 %v1589, 2147483648
    %v1659 = vxor.u32 %v1593, 2147483648
    %v1660 = vxor.u32 %v1595, 2147483648
    %v1661 = vxor.u32 %v1597, 2147483648
    %v1662 = vxor.u32 %v1599, 2147483648
    %v1663 = vxor.u32 %v1603, 2147483648
    %v1664 = vxor.u32 %v1605, 2147483648
    %v1665 = vxor.u32 %v1607, 2147483648
    %v1666 = vxor.u32 %v1609, 2147483648
    %v1667 = vxor.u32 %v1613, 2147483648
    %v1668 = vxor.u32 %v1615, 2147483648
    %v1669 = vxor.u32 %v1617, 2147483648
    %v1670 = vxor.u32 %v1619, 2147483648
    %v1671 = vxor.u32 %v1623, 2147483648
    %v1672 = vxor.u32 %v1625, 2147483648
    %v1673 = vxor.u32 %v1627, 2147483648
    %v1674 = vxor.u32 %v1629, 2147483648
    %v1675 = vxor.u32 %v1633, 2147483648
    %v1676 = vxor.u32 %v1635, 2147483648
    %v1677 = vxor.u32 %v1637, 2147483648
    %v1678 = vxor.u32 %v1639, 2147483648
    %v1679 = vxor.u32 %v1643, 2147483648
    %v1680 = vxor.u32 %v1645, 2147483648
    %v1681 = vxor.u32 %v1647, 2147483648
    %v1682 = vxor.u32 %v1649, 2147483648
    %v1683 = vmul.f32 %v1651, 1.442695
    %v1684 = vpow.pop %v1683
    %v1685 = vmul.f32 %v1652, 1.442695
    %v1686 = vpow.pop %v1685
    %v1687 = vmul.f32 %v1653, 1.442695
    %v1688 = vpow.pop %v1687
    %v1689 = vmul.f32 %v1654, 1.442695
    %v1690 = vpow.pop %v1689
    %v1691 = vmul.f32 %v1655, 1.442695
    %v1692 = vpow.pop %v1691
    %v1693 = vmul.f32 %v1656, 1.442695
    %v1694 = vpow.pop %v1693
    %v1695 = vmul.f32 %v1657, 1.442695
    %v1696 = vpow.pop %v1695
    %v1697 = vmul.f32 %v1658, 1.442695
    %v1698 = vpow.pop %v1697
    %v1699 = vmul.f32 %v1659, 1.442695
    %v1700 = vpow.pop %v1699
    %v1701 = vmul.f32 %v1660, 1.442695
    %v1702 = vpow.pop %v1701
    %v1703 = vmul.f32 %v1661, 1.442695
    %v1704 = vpow.pop %v1703
    %v1705 = vmul.f32 %v1662, 1.442695
    %v1706 = vpow.pop %v1705
    %v1707 = vmul.f32 %v1663, 1.442695
    %v1708 = vpow.pop %v1707
    %v1709 = vmul.f32 %v1664, 1.442695
    %v1710 = vpow.pop %v1709
    %v1711 = vmul.f32 %v1665, 1.442695
    %v1712 = vpow.pop %v1711
    %v1713 = vmul.f32 %v1666, 1.442695
    %v1714 = vpow.pop %v1713
    %v1715 = vmul.f32 %v1667, 1.442695
    %v1716 = vpow.pop %v1715
    %v1717 = vmul.f32 %v1668, 1.442695
    %v1718 = vpow.pop %v1717
    %v1719 = vmul.f32 %v1669, 1.442695
    %v1720 = vpow.pop %v1719
    %v1721 = vmul.f32 %v1670, 1.442695
    %v1722 = vpow.pop %v1721
    %v1723 = vmul.f32 %v1671, 1.442695
    %v1724 = vpow.pop %v1723
    %v1725 = vmul.f32 %v1672, 1.442695
    %v1726 = vpow.pop %v1725
    %v1727 = vmul.f32 %v1673, 1.442695
    %v1728 = vpow.pop %v1727
    %v1729 = vmul.f32 %v1674, 1.442695
    %v1730 = vpow.pop %v1729
    %v1731 = vmul.f32 %v1675, 1.442695
    %v1732 = vpow.pop %v1731
    %v1733 = vmul.f32 %v1676, 1.442695
    %v1734 = vpow.pop %v1733
    %v1735 = vmul.f32 %v1677, 1.442695
    %v1736 = vpow.pop %v1735
    %v1737 = vmul.f32 %v1678, 1.442695
    %v1738 = vpow.pop %v1737
    %v1739 = vmul.f32 %v1679, 1.442695
    %v1740 = vpow.pop %v1739
    %v1741 = vmul.f32 %v1680, 1.442695
    %v1742 = vpow.pop %v1741
    %v1743 = vmul.f32 %v1681, 1.442695
    %v1744 = vpow.pop %v1743
    %v1745 = vmul.f32 %v1682, 1.442695
    %v1746 = vpow.pop %v1745
    %v1747 = vadd.f32 %v1684, 1.0
    %v1748 = vadd.f32 %v1686, 1.0
    %v1749 = vadd.f32 %v1688, 1.0
    %v1750 = vadd.f32 %v1690, 1.0
    %v1751 = vadd.f32 %v1692, 1.0
    %v1752 = vadd.f32 %v1694, 1.0
    %v1753 = vadd.f32 %v1696, 1.0
    %v1754 = vadd.f32 %v1698, 1.0
    %v1755 = vadd.f32 %v1700, 1.0
    %v1756 = vadd.f32 %v1702, 1.0
    %v1757 = vadd.f32 %v1704, 1.0
    %v1758 = vadd.f32 %v1706, 1.0
    %v1759 = vadd.f32 %v1708, 1.0
    %v1760 = vadd.f32 %v1710, 1.0
    %v1761 = vadd.f32 %v1712, 1.0
    %v1762 = vadd.f32 %v1714, 1.0
    %v1763 = vadd.f32 %v1716, 1.0
    %v1764 = vadd.f32 %v1718, 1.0
    %v1765 = vadd.f32 %v1720, 1.0
    %v1766 = vadd.f32 %v1722, 1.0
    %v1767 = vadd.f32 %v1724, 1.0
    %v1768 = vadd.f32 %v1726, 1.0
    %v1769 = vadd.f32 %v1728, 1.0
    %v1770 = vadd.f32 %v1730, 1.0
    %v1771 = vadd.f32 %v1732, 1.0
    %v1772 = vadd.f32 %v1734, 1.0
    %v1773 = vadd.f32 %v1736, 1.0
    %v1774 = vadd.f32 %v1738, 1.0
    %v1775 = vadd.f32 %v1740, 1.0
    %v1776 = vadd.f32 %v1742, 1.0
    %v1777 = vadd.f32 %v1744, 1.0
    %v1778 = vadd.f32 %v1746, 1.0
    %v1779 = vrcp.pop %v1747
    %v1780 = vmul.f32 1.0, %v1779
    %v1781 = vrcp.pop %v1748
    %v1782 = vmul.f32 1.0, %v1781
    %v1783 = vrcp.pop %v1749
    %v1784 = vmul.f32 1.0, %v1783
    %v1785 = vrcp.pop %v1750
    %v1786 = vmul.f32 1.0, %v1785
    %v1787 = vrcp.pop %v1751
    %v1788 = vmul.f32 1.0, %v1787
    %v1789 = vrcp.pop %v1752
    %v1790 = vmul.f32 1.0, %v1789
    %v1791 = vrcp.pop %v1753
    %v1792 = vmul.f32 1.0, %v1791
    %v1793 = vrcp.pop %v1754
    %v1794 = vmul.f32 1.0, %v1793
    %v1795 = vrcp.pop %v1755
    %v1796 = vmul.f32 1.0, %v1795
    %v1797 = vrcp.pop %v1756
    %v1798 = vmul.f32 1.0, %v1797
    %v1799 = vrcp.pop %v1757
    %v1800 = vmul.f32 1.0, %v1799
    %v1801 = vrcp.pop %v1758
    %v1802 = vmul.f32 1.0, %v1801
    %v1803 = vrcp.pop %v1759
    %v1804 = vmul.f32 1.0, %v1803
    %v1805 = vrcp.pop %v1760
    %v1806 = vmul.f32 1.0, %v1805
    %v1807 = vrcp.pop %v1761
    %v1808 = vmul.f32 1.0, %v1807
    %v1809 = vrcp.pop %v1762
    %v1810 = vmul.f32 1.0, %v1809
    %v1811 = vrcp.pop %v1763
    %v1812 = vmul.f32 1.0, %v1811
    %v1813 = vrcp.pop %v1764
    %v1814 = vmul.f32 1.0, %v1813
    %v1815 = vrcp.pop %v1765
    %v1816 = vmul.f32 1.0, %v1815
    %v1817 = vrcp.pop %v1766
    %v1818 = vmul.f32 1.0, %v1817
    %v1819 = vrcp.pop %v1767
    %v1820 = vmul.f32 1.0, %v1819
    %v1821 = vrcp.pop %v1768
    %v1822 = vmul.f32 1.0, %v1821
    %v1823 = vrcp.pop %v1769
    %v1824 = vmul.f32 1.0, %v1823
    %v1825 = vrcp.pop %v1770
    %v1826 = vmul.f32 1.0, %v1825
    %v1827 = vrcp.pop %v1771
    %v1828 = vmul.f32 1.0, %v1827
    %v1829 = vrcp.pop %v1772
    %v1830 = vmul.f32 1.0, %v1829
    %v1831 = vrcp.pop %v1773
    %v1832 = vmul.f32 1.0, %v1831
    %v1833 = vrcp.pop %v1774
    %v1834 = vmul.f32 1.0, %v1833
    %v1835 = vrcp.pop %v1775
    %v1836 = vmul.f32 1.0, %v1835
    %v1837 = vrcp.pop %v1776
    %v1838 = vmul.f32 1.0, %v1837
    %v1839 = vrcp.pop %v1777
    %v1840 = vmul.f32 1.0, %v1839
    %v1841 = vrcp.pop %v1778
    %v1842 = vmul.f32 1.0, %v1841
    %1843 = vst [vmem:[#allocation2] sm:$0xff] %v1780
    %1844 = vst [vmem:[#allocation2 + $0x8] sm:$0xff] %v1782
    %1845 = vst [vmem:[#allocation2 + $0x10] sm:$0xff] %v1784
    %1846 = vst [vmem:[#allocation2 + $0x18] sm:$0xff] %v1786
    %1847 = vst [vmem:[#allocation2 + $0x20] sm:$0xff] %v1788
    %1848 = vst [vmem:[#allocation2 + $0x28] sm:$0xff] %v1790
    %1849 = vst [vmem:[#allocation2 + $0x30] sm:$0xff] %v1792
    %1850 = vst [vmem:[#allocation2 + $0x38] sm:$0xff] %v1794
    %1851 = vst [vmem:[#allocation2 + $0x40] sm:$0xff] %v1796
    %1852 = vst [vmem:[#allocation2 + $0x48] sm:$0xff] %v1798
    %1853 = vst [vmem:[#allocation2 + $0x50] sm:$0xff] %v1800
    %1854 = vst [vmem:[#allocation2 + $0x58] sm:$0xff] %v1802
    %1855 = vst [vmem:[#allocation2 + $0x60] sm:$0xff] %v1804
    %1856 = vst [vmem:[#allocation2 + $0x68] sm:$0xff] %v1806
    %1857 = vst [vmem:[#allocation2 + $0x70] sm:$0xff] %v1808
    %1858 = vst [vmem:[#allocation2 + $0x78] sm:$0xff] %v1810
    %1859 = vst [vmem:[#allocation2 + $0x80] sm:$0xff] %v1812
    %1860 = vst [vmem:[#allocation2 + $0x88] sm:$0xff] %v1814
    %1861 = vst [vmem:[#allocation2 + $0x90] sm:$0xff] %v1816
    %1862 = vst [vmem:[#allocation2 + $0x98] sm:$0xff] %v1818
    %1863 = vst [vmem:[#allocation2 + $0xa0] sm:$0xff] %v1820
    %1864 = vst [vmem:[#allocation2 + $0xa8] sm:$0xff] %v1822
    %1865 = vst [vmem:[#allocation2 + $0xb0] sm:$0xff] %v1824
    %1866 = vst [vmem:[#allocation2 + $0xb8] sm:$0xff] %v1826
    %1867 = vst [vmem:[#allocation2 + $0xc0] sm:$0xff] %v1828
    %1868 = vst [vmem:[#allocation2 + $0xc8] sm:$0xff] %v1830
    %1869 = vst [vmem:[#allocation2 + $0xd0] sm:$0xff] %v1832
    %1870 = vst [vmem:[#allocation2 + $0xd8] sm:$0xff] %v1834
    %1871 = vst [vmem:[#allocation2 + $0xe0] sm:$0xff] %v1836
    %1872 = vst [vmem:[#allocation2 + $0xe8] sm:$0xff] %v1838
    %1873 = vst [vmem:[#allocation2 + $0xf0] sm:$0xff] %v1840
    %1874 = vst [vmem:[#allocation2 + $0xf8] sm:$0xff] %v1842
    // Predicated region
    $region26: #{mlp_autoencoder_forward.1} parent=1 // pred_check
      _
    $region27: #{mlp_autoencoder_forward.1} parent=1 // pred_check_branch
      %1876 = sbr.rel (0) target = $region29
    $region28: #{mlp_autoencoder_forward.1} parent=1 // pred_region
      %s1878 = ssub.s32 4096, 4096
      %1879 = vsyncadd [#allocation3], %s1878
      %s1880 = sshll.u32 [#allocation2], 4
      %s1881 = int_to_ptr.vmem [resolvable:$true] %s1880
      %1886 = dma.vmem_to_hbm [thread:$0]  %s1881, 4096, %s6, [#allocation3], 256, 256, 16
    $region29: #{mlp_autoencoder_forward.1} parent=1 // pred_fallthru
      _
    // Predicated region
    $region30: #{mlp_autoencoder_forward.1} parent=1 // pred_check
      _
    $region31: #{mlp_autoencoder_forward.1} parent=1 // pred_check_branch
      %1888 = sbr.rel (0) target = $region33
    $region32: #{mlp_autoencoder_forward.1} parent=1 // pred_region
      %1889 = dma.done [#allocation3], 4096
    $region33: #{mlp_autoencoder_forward.1} parent=1 // pred_fallthru
      _
    %1890 = vsyncpa [#allocation3], 1

</llo_original>
